<compile_context>
chip_gen: v7x
topology: tpu7x:2x2x1
jax: 0.10.0
libtpu: 0.0.40
codegen_flags: <defaults>
</compile_context>

<pallas_src>
import math

import jax
import jax.numpy as jnp
from jax.experimental import pallas as pl
from jax.experimental.pallas import tpu as pltpu


def _choose_tile(n, target, align):
    """Largest tile <= target that divides n and is a multiple of `align`;
    falls back to the full dimension (always legal) otherwise."""
    if n <= target or n % align != 0:
        return n
    t = (target // align) * align
    while n % t != 0:
        t -= align
    return t


# ----------------------------------------------------------------------------
# Kernel 1: GCN layer-1 -> layer-2 support
#   support2 = relu(adj @ (x @ W1) + b1) @ W2        (s1 = x @ W1 precomputed)
# grid = (row tiles, adj-K tiles); K is a reduction with a VMEM accumulator.
# ----------------------------------------------------------------------------
def _gcn_support_kernel(adj_ref, s1_ref, b1_ref, w2_ref, s2_ref, acc_ref):
    k = pl.program_id(1)

    @pl.when(k == 0)
    def _():
        acc_ref[...] = jnp.zeros_like(acc_ref)

    acc_ref[...] += jnp.dot(adj_ref[...], s1_ref[...],
                            preferred_element_type=jnp.float32)

    @pl.when(k == pl.num_programs(1) - 1)
    def _():
        h = jnp.maximum(acc_ref[...] + b1_ref[...], 0.0)   # ReLU; dropout = identity
        s2_ref[...] = jnp.dot(h, w2_ref[...],
                              preferred_element_type=jnp.float32
                              ).astype(s2_ref.dtype)


# ----------------------------------------------------------------------------
# Kernel 2: GCN layer-2 (adj @ support2 + b2) + 5 Linear projections + fusion.
# Emits one lane-dense (TM, 384) slab per row tile.
# ----------------------------------------------------------------------------
def _encoder_kernel(fw_ref, adj_ref, s2_ref, b2_ref,
                    img_ref, att_ref, rel_ref, name_ref, char_ref,
                    wi_ref, wa_ref, wr_ref, wn_ref, wc_ref,
                    bi_ref, ba_ref, br_ref, bn_ref, bc_ref,
                    out_ref, acc_ref):
    f32 = jnp.float32
    k = pl.program_id(1)

    @pl.when(k == 0)
    def _():
        acc_ref[...] = jnp.zeros_like(acc_ref)

    # GCN layer 2: gph = adj @ support2 + b2 (reduction over grid axis 1).
    acc_ref[...] += jnp.dot(adj_ref[...], s2_ref[...],
                            preferred_element_type=f32)

    @pl.when(k == pl.num_programs(1) - 1)
    def _():
        gph = acc_ref[...] + b2_ref[...]

        # Five nn.Linear projections (bf16 MXU operands, f32 accumulation).
        img = jnp.dot(img_ref[...], wi_ref[...], preferred_element_type=f32) + bi_ref[...]
        att = jnp.dot(att_ref[...], wa_ref[...], preferred_element_type=f32) + ba_ref[...]
        rel = jnp.dot(rel_ref[...], wr_ref[...], preferred_element_type=f32) + br_ref[...]
        name = jnp.dot(name_ref[...], wn_ref[...], preferred_element_type=f32) + bn_ref[...]
        char = jnp.dot(char_ref[...], wc_ref[...], preferred_element_type=f32) + bc_ref[...]

        # MultiModalFusion: fw_i * F.normalize(e).  The softmaxed modal weight
        # is folded into the (TM, 1) rsqrt scale (EUP slot).
        def scale(e, idx):
            ss = jnp.sum(e * e, axis=1, keepdims=True)
            # F.normalize: x / max(||x||, 1e-12) == x * rsqrt(max(||x||^2, 1e-24))
            return fw_ref[idx] * jax.lax.rsqrt(jnp.maximum(ss, 1e-24))

        # Lane-dense slab: [gph | img att rel name char | joint(img,att,rel,gph,name,char)]
        slab = jnp.concatenate(
            [gph, img, att, rel, name, char,
             img * scale(img, 0), att * scale(att, 1), rel * scale(rel, 2),
             gph * scale(gph, 3), name * scale(name, 4), char * scale(char, 5)],
            axis=1)
        out_ref[...] = slab.astype(out_ref.dtype)


# ----------------------------------------------------------------------------
# MultiModalEncoder (params deterministic, eval mode)
# ----------------------------------------------------------------------------
class MultiModalEncoderPallas:
    def __init__(self, key, ent_num, img_feature_dim, char_feature_dim,
                 hidden_units=(32, 32, 32), attr_dim=32, img_dim=32,
                 char_dim=32, modal_num=6):
        self.n_units = list(hidden_units)
        self.input_dim = self.n_units[0]
        keys = jax.random.split(key, 16)

        def lin_params(kw, kb, fan_in, fan_out):
            # PyTorch Linear default init: U(-1/sqrt(fan_in), 1/sqrt(fan_in));
            # weight kept transposed as (in, out) so kernels compute x @ W + b.
            bound = 1.0 / math.sqrt(fan_in)
            w = jax.random.uniform(kw, (fan_in, fan_out), jnp.float32, -bound, bound)
            b = jax.random.uniform(kb, (1, fan_out), jnp.float32, -bound, bound)
            return w, b

        # entity embedding: normal(std = 1/sqrt(ent_num))
        self.entity_emb = (1.0 / math.sqrt(ent_num)) * jax.random.normal(
            keys[0], (ent_num, self.input_dim), jnp.float32)

        # projections in FUSION order: img, att, rel, name, char
        img_fc = lin_params(keys[5], keys[6], img_feature_dim, img_dim)
        att_fc = lin_params(keys[3], keys[4], 1000, attr_dim)
        rel_fc = lin_params(keys[1], keys[2], 1000, attr_dim)
        name_fc = lin_params(keys[7], keys[8], 300, char_dim)
        char_fc = lin_params(keys[9], keys[10], char_feature_dim, char_dim)
        fcs = [img_fc, att_fc, rel_fc, name_fc, char_fc]
        self.proj_w_bf = [w.astype(jnp.bfloat16) for w, _ in fcs]   # bf16 MXU operands
        self.proj_b = [b for _, b in fcs]                            # f32 biases
        self.proj_out_dims = [w.shape[1] for w, _ in fcs]

        # GCN params (GraphConvolution weight (in, out))
        self.gc1_w, self.gc1_b = lin_params(keys[11], keys[12],
                                            self.n_units[0], self.n_units[1])
        self.gc2_w, self.gc2_b = lin_params(keys[13], keys[14],
                                            self.n_units[1], self.n_units[2])

        # fusion weights: ones((modal_num, 1))
        self.fusion_weight = jnp.ones((modal_num, 1), jnp.float32)

    def __call__(self, input_idx, adj, img_features, rel_features, att_features,
                 name_features, char_features, *, row_tile=256, k_tile=512):
        N = int(input_idx.shape[0])
        d_hid = self.n_units[1]
        d_gph = self.n_units[2]
        d_img, d_att, d_rel, d_name, d_char = self.proj_out_dims
        d_proj = sum(self.proj_out_dims)
        d_joint = d_img + d_att + d_rel + d_gph + d_name + d_char
        d_slab = d_gph + d_proj + d_joint

        # ---- XLA glue: embedding gather + tiny layer-1 support + bf16 casts ----
        x = jnp.take(self.entity_emb, input_idx, axis=0)
        s1 = (x @ self.gc1_w).astype(jnp.bfloat16)          # (N, d_hid), ~128 B/row
        adj_bf = adj.astype(jnp.bfloat16)
        feats = [f.astype(jnp.bfloat16) for f in
                 (img_features, att_features, rel_features, name_features,
                  char_features)]                            # fusion order
        feat_dims = [int(f.shape[1]) for f in feats]

        # softmax over the (6,1) modal weight -> 6 scalars through SMEM
        # TODO(synk): reference prints the modal weights host-side; no device print.
        fw = jax.nn.softmax(self.fusion_weight.reshape(-1)).astype(jnp.float32)

        # ---- tiling ----
        tm = _choose_tile(N, row_tile, 8)
        tk = _choose_tile(N, k_tile, 128)
        grid = (N // tm, N // tk)
        cparams = pltpu.CompilerParams(
            dimension_semantics=("parallel", "arbitrary"),
            vmem_limit_bytes=32 * 1024 * 1024)

        # ---- kernel 1: support2 = relu(adj @ s1 + b1) @ W2 ----
        cost1 = pl.CostEstimate(
            flops=2 * N * N * d_hid + 2 * N * d_hid * d_gph,
            transcendentals=0,
            bytes_accessed=N * N * 2 + grid[0] * N * d_hid * 2 + N * d_gph * 2)
        support2 = pl.pallas_call(
            _gcn_support_kernel,
            out_shape=jax.ShapeDtypeStruct((N, d_gph), jnp.bfloat16),
            grid=grid,
            in_specs=[
                pl.BlockSpec((tm, tk), lambda i, k: (i, k)),        # adj tile
                pl.BlockSpec((tk, d_hid), lambda i, k: (k, 0)),     # s1 = x @ W1
                pl.BlockSpec((1, d_hid), lambda i, k: (0, 0)),      # b1 (resident)
                pl.BlockSpec((d_hid, d_gph), lambda i, k: (0, 0)),  # W2 (resident)
            ],
            out_specs=pl.BlockSpec((tm, d_gph), lambda i, k: (i, 0)),
            scratch_shapes=[pltpu.VMEM((tm, d_hid), jnp.float32)],
            compiler_params=cparams,
            cost_estimate=cost1,
        )(adj_bf, s1, self.gc1_b, self.gc2_w)

        # ---- kernel 2: GCN layer 2 + 5 projections + fusion -> (N, 384) slab ----
        cost2 = pl.CostEstimate(
            flops=2 * N * N * d_gph + 2 * N * sum(feat_dims) * 32,
            transcendentals=6 * N,
            bytes_accessed=(N * N * 2 + N * sum(feat_dims) * 2 + N * d_slab * 4
                            + sum(feat_dims) * 32 * 2 + grid[0] * N * d_gph * 2))
        in_specs = [
            pl.BlockSpec(memory_space=pltpu.MemorySpace.SMEM),      # fw (6,) scalars
            pl.BlockSpec((tm, tk), lambda i, k: (i, k)),            # adj tile
            pl.BlockSpec((tk, d_gph), lambda i, k: (k, 0)),         # support2
            pl.BlockSpec((1, d_gph), lambda i, k: (0, 0)),          # b2 (resident)
        ]
        in_specs += [pl.BlockSpec((tm, fd), lambda i, k: (i, 0)) for fd in feat_dims]
        in_specs += [pl.BlockSpec(w.shape, lambda i, k: (0, 0)) for w in self.proj_w_bf]
        in_specs += [pl.BlockSpec(b.shape, lambda i, k: (0, 0)) for b in self.proj_b]

        slab = pl.pallas_call(
            _encoder_kernel,
            out_shape=jax.ShapeDtypeStruct((N, d_slab), jnp.float32),
            grid=grid,
            in_specs=in_specs,
            out_specs=pl.BlockSpec((tm, d_slab), lambda i, k: (i, 0)),
            scratch_shapes=[pltpu.VMEM((tm, d_gph), jnp.float32)],
            compiler_params=cparams,
            cost_estimate=cost2,
        )(fw, adj_bf, support2, self.gc2_b, *feats, *self.proj_w_bf, *self.proj_b)

        # ---- slice the 7 logical tensors out of the lane-dense slab ----
        off = 0
        gph_emb = slab[:, off:off + d_gph]; off += d_gph
        img_emb = slab[:, off:off + d_img]; off += d_img
        att_emb = slab[:, off:off + d_att]; off += d_att
        rel_emb = slab[:, off:off + d_rel]; off += d_rel
        name_emb = slab[:, off:off + d_name]; off += d_name
        char_emb = slab[:, off:off + d_char]; off += d_char
        joint_emb = slab[:, off:off + d_joint]
        # TODO(synk): use_project_head=True path (ProjectionHead) is not defined
        # in the reference snippet, so it is not implemented.
        return gph_emb, img_emb, rel_emb, att_emb, name_emb, char_emb, joint_emb


# ----------------------------------------------------------------------------
if __name__ == "__main__":
    ENT_NUM = 1024        # exercises the (row, k) grid: tiles (256, 512) -> (4, 2)
    IMG_FEAT_DIM = 64
    CHAR_FEAT_DIM = 100

    key = jax.random.PRNGKey(0)
    k_model, k_adj, k_img, k_rel, k_att, k_name, k_char = jax.random.split(key, 7)

    model = MultiModalEncoderPallas(k_model, ENT_NUM, IMG_FEAT_DIM, CHAR_FEAT_DIM)

    input_idx = jnp.arange(ENT_NUM, dtype=jnp.int32)
    # symmetric row-normalized dense adjacency
    a = jax.random.uniform(k_adj, (ENT_NUM, ENT_NUM), jnp.float32)
    a = (a + a.T) * 0.5 + jnp.eye(ENT_NUM, dtype=jnp.float32)
    adj = a / jnp.sum(a, axis=1, keepdims=True)

    img_features = jax.random.normal(k_img, (ENT_NUM, IMG_FEAT_DIM), jnp.float32)
    rel_features = jax.random.normal(k_rel, (ENT_NUM, 1000), jnp.float32)
    att_features = jax.random.normal(k_att, (ENT_NUM, 1000), jnp.float32)
    name_features = jax.random.normal(k_name, (ENT_NUM, 300), jnp.float32)
    char_features = jax.random.normal(k_char, (ENT_NUM, CHAR_FEAT_DIM), jnp.float32)

    outs = model(input_idx, adj, img_features, rel_features, att_features,
                 name_features, char_features)
    outs = jax.block_until_ready(outs)

    gph, img, rel, att, name, char, joint = outs
    assert joint.shape == (ENT_NUM, 6 * 32)
    assert all(o.shape == (ENT_NUM, 32) for o in (gph, img, rel, att, name, char))
    assert all(bool(jnp.isfinite(o).all()) for o in outs)
    print("KERNEL_OK")
</pallas_src>

<mosaic_0001>
module attributes {stable_mosaic.version = 11 : i64} {
  func.func @_gcn_support_kernel(%arg0: i32, %arg1: i32, %arg2: memref<256x512xbf16, #tpu.memory_space<vmem>>, %arg3: memref<512x32xbf16, #tpu.memory_space<vmem>>, %arg4: memref<1x32xf32, #tpu.memory_space<vmem>>, %arg5: memref<32x32xf32, #tpu.memory_space<vmem>>, %arg6: memref<256x32xbf16, #tpu.memory_space<vmem>>, %arg7: memref<256x32xf32, #tpu.memory_space<vmem>>) attributes {dimension_semantics = [#tpu.dimension_semantics<parallel>, #tpu.dimension_semantics<arbitrary>], iteration_bounds = array<i64: 4, 2>, scalar_prefetch = 0 : i64, scratch_operands = 1 : i64, tpu.core_type = #tpu.core_type<tc>, window_params = [{transform_indices = @transform_0, window_bounds = array<i64: 256, 512>}, {transform_indices = @transform_1, window_bounds = array<i64: 512, 32>}, {pipeline_mode = #tpu.pipeline_mode<synchronous>, transform_indices = @transform_2, window_bounds = array<i64: 1, 32>}, {pipeline_mode = #tpu.pipeline_mode<synchronous>, transform_indices = @transform_3, window_bounds = array<i64: 32, 32>}, {transform_indices = @transform_4, window_bounds = array<i64: 256, 32>}]} {
    %c0_i32 = arith.constant 0 : i32
    %0 = arith.cmpi eq, %arg1, %c0_i32 : i32
    %1 = arith.extui %0 : i1 to i32
    %c0_i32_0 = arith.constant 0 : i32
    %2 = arith.cmpi ne, %1, %c0_i32_0 : i32
    scf.if %2 {
      %cst_9 = arith.constant 0.000000e+00 : f32
      %12 = vector.broadcast %cst_9 : f32 to vector<256x32xf32>
      %c0_10 = arith.constant 0 : index
      %c0_11 = arith.constant 0 : index
      %13 = vector.load %arg7[%c0_10, %c0_11] : memref<256x32xf32, #tpu.memory_space<vmem>>, vector<256x32xf32>
      tpu.vector_store %arg7[%c0_10, %c0_11], %12 {strides = array<i32>} : memref<256x32xf32, #tpu.memory_space<vmem>>, vector<256x32xf32>,
    } else {
    }
    %c0 = arith.constant 0 : index
    %c0_1 = arith.constant 0 : index
    %3 = vector.load %arg7[%c0, %c0_1] : memref<256x32xf32, #tpu.memory_space<vmem>>, vector<256x32xf32>
    %c0_2 = arith.constant 0 : index
    %c0_3 = arith.constant 0 : index
    %4 = vector.load %arg2[%c0_2, %c0_3] : memref<256x512xbf16, #tpu.memory_space<vmem>>, vector<256x512xbf16>
    %c0_4 = arith.constant 0 : index
    %c0_5 = arith.constant 0 : index
    %5 = vector.load %arg3[%c0_4, %c0_5] : memref<512x32xbf16, #tpu.memory_space<vmem>>, vector<512x32xbf16>
    %cst = arith.constant dense<0.000000e+00> : vector<256x32xf32>
    %6 = tpu.matmul %4, %5, %cst {dimension_numbers = #tpu.dot_dimension_numbers<[1], [0], [0], [1], [0, 0, 1, 1], [], []>} : vector<256x512xbf16>, vector<512x32xbf16>, vector<256x32xf32> -> vector<256x32xf32>
    %7 = arith.addf %3, %6 : vector<256x32xf32>
    %c0_6 = arith.constant 0 : index
    %c0_7 = arith.constant 0 : index
    %8 = vector.load %arg7[%c0_6, %c0_7] : memref<256x32xf32, #tpu.memory_space<vmem>>, vector<256x32xf32>
    tpu.vector_store %arg7[%c0_6, %c0_7], %7 {strides = array<i32>} : memref<256x32xf32, #tpu.memory_space<vmem>>, vector<256x32xf32>,
    %c1_i32 = arith.constant 1 : i32
    %9 = arith.cmpi eq, %arg1, %c1_i32 : i32
    %10 = arith.extui %9 : i1 to i32
    %c0_i32_8 = arith.constant 0 : i32
    %11 = arith.cmpi ne, %10, %c0_i32_8 : i32
    scf.if %11 {
      %c0_9 = arith.constant 0 : index
      %c0_10 = arith.constant 0 : index
      %12 = vector.load %arg7[%c0_9, %c0_10] : memref<256x32xf32, #tpu.memory_space<vmem>>, vector<256x32xf32>
      %c0_11 = arith.constant 0 : index
      %c0_12 = arith.constant 0 : index
      %13 = vector.load %arg4[%c0_11, %c0_12] : memref<1x32xf32, #tpu.memory_space<vmem>>, vector<1x32xf32>
      %14 = vector.broadcast %13 : vector<1x32xf32> to vector<256x32xf32>
      %15 = arith.addf %12, %14 : vector<256x32xf32>
      %cst_13 = arith.constant 0.000000e+00 : f32
      %16 = vector.broadcast %cst_13 : f32 to vector<256x32xf32>
      %17 = arith.maximumf %15, %16 : vector<256x32xf32>
      %c0_14 = arith.constant 0 : index
      %c0_15 = arith.constant 0 : index
      %18 = vector.load %arg5[%c0_14, %c0_15] : memref<32x32xf32, #tpu.memory_space<vmem>>, vector<32x32xf32>
      %cst_16 = arith.constant dense<0.000000e+00> : vector<256x32xf32>
      %19 = tpu.matmul %17, %18, %cst_16 {dimension_numbers = #tpu.dot_dimension_numbers<[1], [0], [0], [1], [0, 0, 1, 1], [], []>} : vector<256x32xf32>, vector<32x32xf32>, vector<256x32xf32> -> vector<256x32xf32>
      %20 = arith.truncf %19 : vector<256x32xf32> to vector<256x32xbf16>
      %c0_17 = arith.constant 0 : index
      %c0_18 = arith.constant 0 : index
      %21 = vector.load %arg6[%c0_17, %c0_18] : memref<256x32xbf16, #tpu.memory_space<vmem>>, vector<256x32xbf16>
      tpu.vector_store %arg6[%c0_17, %c0_18], %20 {strides = array<i32>} : memref<256x32xbf16, #tpu.memory_space<vmem>>, vector<256x32xbf16>,
    } else {
    }
    return
  }
  func.func @transform_0(%arg0: i32, %arg1: i32) -> (i32, i32) {
    %c0_i32 = arith.constant 0 : i32
    return %arg0, %arg1 : i32, i32
  }
  func.func @transform_1(%arg0: i32, %arg1: i32) -> (i32, i32) {
    %c0_i32 = arith.constant 0 : i32
    %c0_i32_0 = arith.constant 0 : i32
    return %arg1, %c0_i32 : i32, i32
  }
  func.func @transform_2(%arg0: i32, %arg1: i32) -> (i32, i32) {
    %c0_i32 = arith.constant 0 : i32
    %c0_i32_0 = arith.constant 0 : i32
    %c0_i32_1 = arith.constant 0 : i32
    return %c0_i32, %c0_i32_0 : i32, i32
  }
  func.func @transform_3(%arg0: i32, %arg1: i32) -> (i32, i32) {
    %c0_i32 = arith.constant 0 : i32
    %c0_i32_0 = arith.constant 0 : i32
    %c0_i32_1 = arith.constant 0 : i32
    return %c0_i32, %c0_i32_0 : i32, i32
  }
  func.func @transform_4(%arg0: i32, %arg1: i32) -> (i32, i32) {
    %c0_i32 = arith.constant 0 : i32
    %c0_i32_0 = arith.constant 0 : i32
    return %arg0, %c0_i32 : i32, i32
  }
}

</mosaic_0001>

<llo_original>
// kernel: tpu_custom_call.1
$region0: #{tpu_custom_call.1}
  #allocation0 [shape = 'u32[]', space=smem, size = 0x4, offset = 0x4, fixed_abs, tag = 'smem constant byte address 0x4 - core index']
  #allocation1 [shape = 'u32[144,128]{1,0:T(1,128)}', space=vmem, size = 0x12000, scoped, tag = 'internal scratch']
  #allocation2 [shape = 'f32[256,32]{1,0:T(8,128)}', space=vmem, size = 0x20000, scoped, tag = 'scratch operand']
  %s0 = inlined_call_operand.hbm [shape: bf16[1024,1024], index: 0, kind: input, shape index: {}]
  %s1 = inlined_call_operand.vmem [shape: bf16[1024,32], index: 1, kind: input, shape index: {}]
  %s2 = inlined_call_operand.hbm [shape: f32[1,32], index: 2, kind: input, shape index: {}]
  %s3 = inlined_call_operand.hbm [shape: f32[32,32], index: 3, kind: input, shape index: {}]
  %s4 = inlined_call_operand.vmem [shape: bf16[1024,32], index: 4, kind: output, shape index: {}]
  %s5 = sld [smem:[#allocation0]]
  $region69: #{tpu_custom_call.1} parent=0
    _
  %s7 = ssub.s32 1, %s5
  %s8 = scalar_select 0, %s7, %s5
  $region1: #{tpu_custom_call.1} parent=0
    #allocation3 [shape = 'u8[524288]{0}', space=vmem, size = 0x80000, scoped, tag = 'input window, operand 0']
    #allocation4 [shape = 's32[2]{0}', space=sflag, size = 0x8, scoped, tag = 'scoped memory for tpu_custom_call.1']
    #allocation5 [shape = 'u8[512]{0}', space=vmem, size = 0x400, scoped, tag = 'input window, operand 2, single buffered']
    #allocation6 [shape = 's32[1]{0}', space=sflag, size = 0x4, scoped, tag = 'scoped memory for tpu_custom_call.1']
    #allocation7 [shape = 'u8[16384]{0}', space=vmem, size = 0x4000, scoped, tag = 'input window, operand 3, single buffered']
    %9 = vsyncpa [#allocation4], 0
    %s10 = scalar_lea.sflag [#allocation4], 1
    %11 = vsyncpa %s10, 0
    %12 = vsyncpa [#allocation6], 0
    loop: start=0, step=1, limit=10
    $region2: #{tpu_custom_call.1} parent=1 // loop_pre_header
      _
    $region3: #{tpu_custom_call.1} parent=1 // loop_header
      %s14 = sphi 0, %s18
      %p15 = scmp.ge.s32.totalorder %s14, 10
      %s21 = sphi 0, %s33
      %s22 = sphi 0, %s29
      %s23 = sphi 0, %s21
      %s24 = sphi 0, %s22
      %s25 = sphi 0, %s23
      %s26 = sphi 0, %s24
      %s38 = sphi 0, %s40
      %s41 = sphi 0, %s38
      %s42 = sphi 0, %s41
      %s58 = sphi 0, %s42
      %s64 = sphi 0, %s66
      %s67 = sphi 0, %s64
      %s68 = sphi 0, %s67
      %s84 = sphi 0, %s68
      %s88 = sphi 0, %s88
      %s90 = sphi 0, %s88
      %s91 = sphi 0, %s90
      %s105 = sphi 0, %s91
      %s109 = sphi 0, %s109
      %s111 = sphi 0, %s109
      %s112 = sphi 0, %s111
      %s126 = sphi 0, %s112
      %s132 = sphi 0, %s134
      %s135 = sphi 0, %s132
      %s136 = sphi 0, %s135
      %s152 = sphi 0, %s136
    $region4: #{tpu_custom_call.1} parent=1 // loop_header_branch
      %17 = sbr.rel (%p15) target = $region8
    $region5: #{tpu_custom_call.1} parent=1 // loop_body
      %s19 = ssub.s32 %s14, 1
      %s20 = ssub.s32 %s14, 2
      %s27 = sadd.s32 1, %s22
      %p28 = scmp.ge.s32.totalorder %s27, 2
      %s29 = scalar_select %p28, 0, %s27
      %s30 = sadd.s32 1, %s21
      %s31 = scalar_select %p28, %s30, %s21
      %p32 = scmp.ge.s32.totalorder %s31, 4
      %s33 = scalar_select %p32, 0, %s31
      %s34 = ssub.s32 %s21, %s33
      %s35 = ssub.s32 %s22, %s29
      %s36 = sor.u32 %s34, %s35
      %p37 = scmp.eq.s32.totalorder %s36, 0
      %s39 = sadd.s32 %s38, 1
      %s40 = scalar_select %p37, %s38, %s39
      %p43 = pneg %p37
      %p44 = scmp.eq.s32.totalorder %s14, 7
      %p45 = por %p43, %p44
      %p46 = scmp.ne.s32.totalorder %s38, %s41
      %p47 = scmp.eq.s32.totalorder %s14, 0
      %p48 = por %p46, %p47
      %p49 = scmp.ne.s32.totalorder %s38, %s41
      %p50 = scmp.eq.s32.totalorder %s19, 7
      %p51 = por %p49, %p50
      %p52 = scmp.ne.s32.totalorder %s41, %s42
      %p53 = scmp.eq.s32.totalorder %s19, 0
      %p54 = por %p52, %p53
      %p55 = scmp.ne.s32.totalorder %s41, %s42
      %p56 = scmp.eq.s32.totalorder %s20, 7
      %p57 = por %p55, %p56
      %p59 = scmp.ne.s32.totalorder %s42, %s58
      %p60 = scmp.eq.s32.totalorder %s20, 0
      %p61 = por %p59, %p60
      %s62 = ssub.s32 %s22, %s29
      %p63 = scmp.eq.s32.totalorder %s62, 0
      %s65 = sadd.s32 %s64, 1
      %s66 = scalar_select %p63, %s64, %s65
      %p69 = pneg %p63
      %p70 = scmp.eq.s32.totalorder %s14, 7
      %p71 = por %p69, %p70
      %p72 = scmp.ne.s32.totalorder %s64, %s67
      %p73 = scmp.eq.s32.totalorder %s14, 0
      %p74 = por %p72, %p73
      %p75 = scmp.ne.s32.totalorder %s64, %s67
      %p76 = scmp.eq.s32.totalorder %s19, 7
      %p77 = por %p75, %p76
      %p78 = scmp.ne.s32.totalorder %s67, %s68
      %p79 = scmp.eq.s32.totalorder %s19, 0
      %p80 = por %p78, %p79
      %p81 = scmp.ne.s32.totalorder %s67, %s68
      %p82 = scmp.eq.s32.totalorder %s20, 7
      %p83 = por %p81, %p82
      %p85 = scmp.ne.s32.totalorder %s68, %s84
      %p86 = scmp.eq.s32.totalorder %s20, 0
      %p87 = por %p85, %p86
      %s89 = sadd.s32 %s88, 1
      %p92 = scmp.eq.s32.totalorder %s14, 7
      %p93 = scmp.ne.s32.totalorder %s88, %s90
      %p94 = scmp.eq.s32.totalorder %s14, 0
      %p95 = por %p93, %p94
      %p96 = scmp.ne.s32.totalorder %s88, %s90
      %p97 = scmp.eq.s32.totalorder %s19, 7
      %p98 = por %p96, %p97
      %p99 = scmp.ne.s32.totalorder %s90, %s91
      %p100 = scmp.eq.s32.totalorder %s19, 0
      %p101 = por %p99, %p100
      %p102 = scmp.ne.s32.totalorder %s90, %s91
      %p103 = scmp.eq.s32.totalorder %s20, 7
      %p104 = por %p102, %p103
      %p106 = scmp.ne.s32.totalorder %s91, %s105
      %p107 = scmp.eq.s32.totalorder %s20, 0
      %p108 = por %p106, %p107
      %s110 = sadd.s32 %s109, 1
      %p113 = scmp.eq.s32.totalorder %s14, 7
      %p114 = scmp.ne.s32.totalorder %s109, %s111
      %p115 = scmp.eq.s32.totalorder %s14, 0
      %p116 = por %p114, %p115
      %p117 = scmp.ne.s32.totalorder %s109, %s111
      %p118 = scmp.eq.s32.totalorder %s19, 7
      %p119 = por %p117, %p118
      %p120 = scmp.ne.s32.totalorder %s111, %s112
      %p121 = scmp.eq.s32.totalorder %s19, 0
      %p122 = por %p120, %p121
      %p123 = scmp.ne.s32.totalorder %s111, %s112
      %p124 = scmp.eq.s32.totalorder %s20, 7
      %p125 = por %p123, %p124
      %p127 = scmp.ne.s32.totalorder %s112, %s126
      %p128 = scmp.eq.s32.totalorder %s20, 0
      %p129 = por %p127, %p128
      %s130 = ssub.s32 %s21, %s33
      %p131 = scmp.eq.s32.totalorder %s130, 0
      %s133 = sadd.s32 %s132, 1
      %s134 = scalar_select %p131, %s132, %s133
      %p137 = pneg %p131
      %p138 = scmp.eq.s32.totalorder %s14, 7
      %p139 = por %p137, %p138
      %p140 = scmp.ne.s32.totalorder %s132, %s135
      %p141 = scmp.eq.s32.totalorder %s14, 0
      %p142 = por %p140, %p141
      %p143 = scmp.ne.s32.totalorder %s132, %s135
      %p144 = scmp.eq.s32.totalorder %s19, 7
      %p145 = por %p143, %p144
      %p146 = scmp.ne.s32.totalorder %s135, %s136
      %p147 = scmp.eq.s32.totalorder %s19, 0
      %p148 = por %p146, %p147
      %p149 = scmp.ne.s32.totalorder %s135, %s136
      %p150 = scmp.eq.s32.totalorder %s20, 7
      %p151 = por %p149, %p150
      %p153 = scmp.ne.s32.totalorder %s136, %s152
      %p154 = scmp.eq.s32.totalorder %s20, 0
      %p155 = por %p153, %p154
      %p156 = scmp.le.s32.totalorder 1, %s14
      %p157 = scmp.lt.s32.totalorder %s14, 9
      %p158 = pnand %p156, %p157
      %p159 = pneg %p158
      // Predicated region
      $region9: #{tpu_custom_call.1} parent=5 // pred_check
        _
      $region10: #{tpu_custom_call.1} parent=5 // pred_check_branch
        %161 = sbr.rel (%p158) target = $region12
      $region11: #{tpu_custom_call.1} parent=5 // pred_region
        %s162 = ssub.s32 %s14, 1
        // Predicated region
        $region13: #{tpu_custom_call.1} parent=11 // pred_check
          %p163 = pneg %p101
        $region14: #{tpu_custom_call.1} parent=11 // pred_check_branch
          %165 = sbr.rel (%p163) target = $region16
        $region15: #{tpu_custom_call.1} parent=11 // pred_region
          %s167 = ssub.s32 16, 16
          %168 = vsyncadd [#allocation6], %s167
          %s170 = sshll.u32 [#allocation5], 4
          %s171 = int_to_ptr.vmem [resolvable:$true] %s170
          %173 = dma.hbm_to_vmem [thread:$0]  %s2, 16, %s171, [#allocation6]
        $region16: #{tpu_custom_call.1} parent=11 // pred_fallthru
          _
        // Predicated region
        $region17: #{tpu_custom_call.1} parent=11 // pred_check
          %p174 = pneg %p122
        $region18: #{tpu_custom_call.1} parent=11 // pred_check_branch
          %176 = sbr.rel (%p174) target = $region20
        $region19: #{tpu_custom_call.1} parent=11 // pred_region
          %s178 = ssub.s32 512, 512
          %179 = vsyncadd [#allocation6], %s178
          %s180 = sshll.u32 [#allocation7], 4
          %s181 = int_to_ptr.vmem [resolvable:$true] %s180
          %186 = dma.hbm_to_vmem [thread:$0]  %s3, 512, %s181, [#allocation6], 128, 128, 8
        $region20: #{tpu_custom_call.1} parent=11 // pred_fallthru
          _
      $region12: #{tpu_custom_call.1} parent=5 // pred_fallthru
        _
      %p187 = scmp.lt.s32.totalorder %s14, 8
      // Predicated region
      $region21: #{tpu_custom_call.1} parent=5 // pred_check
        %p188 = pneg %p187
      $region22: #{tpu_custom_call.1} parent=5 // pred_check_branch
        %190 = sbr.rel (%p188) target = $region24
      $region23: #{tpu_custom_call.1} parent=5 // pred_region
        // Predicated region
        $region25: #{tpu_custom_call.1} parent=23 // pred_check
          %p191 = pneg %p48
        $region26: #{tpu_custom_call.1} parent=23 // pred_check_branch
          %193 = sbr.rel (%p191) target = $region28
        $region27: #{tpu_custom_call.1} parent=23 // pred_region
          %s194 = sand.u32 %s38, 1
          %s195 = scalar_lea.sflag [#allocation4], %s194
          %s196 = sand.u32 %s38, 1
          %s197 = smul.addr %s196, 512
          %s198 = scalar_lea.vmem [#allocation3], %s197
          %s199 = smul.u32 32, %s21
          %s200 = smul.u32 4, %s22
          %s202 = ssub.s32 8192, 8192
          %203 = vsyncadd %s195, %s202
          %s204 = smul.addr %s199, 8
          %s205 = sadd.s32 %s200, %s204
          %s206 = smul.addr %s205, 64
          %s207 = scalar_lea.hbm %s0, %s206
          %s208 = sshll.u32 %s198, 4
          %s209 = int_to_ptr.vmem [resolvable:$true] %s208
          %214 = dma.hbm_to_vmem [thread:$0]  %s207, 8192, %s209, %s195, 512, 256, 16
        $region28: #{tpu_custom_call.1} parent=23 // pred_fallthru
          _
        // Predicated region
        $region29: #{tpu_custom_call.1} parent=23 // pred_check
          %p215 = pneg %p74
        $region30: #{tpu_custom_call.1} parent=23 // pred_check_branch
          %217 = sbr.rel (%p215) target = $region32
        $region31: #{tpu_custom_call.1} parent=23 // pred_region
          %s218 = smul.u32 64, %s22
          %p219 = scmp.lt.s32.totalorder %s218, 127
          %s220 = scalar_select %p219, %s218, 127
          %s221 = smul.addr %s220, 4
          %s222 = scalar_lea.vmem %s1, %s221
          %s223 = smul.u32 64, %s22
        $region32: #{tpu_custom_call.1} parent=23 // pred_fallthru
          _
      $region24: #{tpu_custom_call.1} parent=5 // pred_fallthru
        _
      %p224 = scmp.le.s32.totalorder 1, %s14
      %p225 = scmp.lt.s32.totalorder %s14, 9
      %p226 = pnand %p224, %p225
      %p227 = pneg %p226
      // Predicated region
      $region33: #{tpu_custom_call.1} parent=5 // pred_check
        _
      $region34: #{tpu_custom_call.1} parent=5 // pred_check_branch
        %229 = sbr.rel (%p226) target = $region36
      $region35: #{tpu_custom_call.1} parent=5 // pred_region
        %s230 = ssub.s32 %s14, 1
        %s231 = sand.u32 %s41, 1
        %s232 = scalar_lea.sflag [#allocation4], %s231
        %s233 = sand.u32 %s41, 1
        %s234 = smul.addr %s233, 512
        %s235 = scalar_lea.vmem [#allocation3], %s234
        // Predicated region
        $region37: #{tpu_custom_call.1} parent=35 // pred_check
          %p236 = pneg %p54
        $region38: #{tpu_custom_call.1} parent=35 // pred_check_branch
          %238 = sbr.rel (%p236) target = $region40
        $region39: #{tpu_custom_call.1} parent=35 // pred_region
          %239 = dma.done %s232, 8192
        $region40: #{tpu_custom_call.1} parent=35 // pred_fallthru
          _
        // Predicated region
        $region41: #{tpu_custom_call.1} parent=35 // pred_check
          %p240 = pneg %p101
        $region42: #{tpu_custom_call.1} parent=35 // pred_check_branch
          %242 = sbr.rel (%p240) target = $region44
        $region43: #{tpu_custom_call.1} parent=35 // pred_region
          %243 = dma.done [#allocation6], 16
        $region44: #{tpu_custom_call.1} parent=35 // pred_fallthru
          _
        // Predicated region
        $region45: #{tpu_custom_call.1} parent=35 // pred_check
          %p244 = pneg %p122
        $region46: #{tpu_custom_call.1} parent=35 // pred_check_branch
          %246 = sbr.rel (%p244) target = $region48
        $region47: #{tpu_custom_call.1} parent=35 // pred_region
          %247 = dma.done [#allocation6], 512
        $region48: #{tpu_custom_call.1} parent=35 // pred_fallthru
          _
        %s248 = sand.u32 %s41, 1
        %s249 = scalar_lea.sflag [#allocation4], %s248
        %s250 = sand.u32 %s41, 1
        %s251 = smul.addr %s250, 512
        %s252 = scalar_lea.vmem [#allocation3], %s251
        %p253 = pneg %p54
        %p254 = pneg %p51
        %s255 = smul.u32 64, %s24
        %p256 = scmp.lt.s32.totalorder %s255, 127
        %s257 = scalar_select %p256, %s255, 127
        %s258 = smul.addr %s257, 4
        %s259 = scalar_lea.vmem %s1, %s258
        %p260 = pneg %p80
        %p261 = pneg %p77
        %p262 = pneg %p101
        %p263 = pneg %p98
        %p264 = pneg %p122
        %p265 = pneg %p119
        %p266 = pneg %p148
        %p267 = pneg %p145
        %s268 = smul.u32 32, %s23
        %p269 = scmp.lt.s32.totalorder %s268, 127
        %s270 = scalar_select %p269, %s268, 127
        %s271 = smul.addr %s270, 4
        %s272 = scalar_lea.vmem %s4, %s271
        %s273 = smul.u32 32, %s23
        %s274 = smul.u32 4, %s24
        %s275 = smul.u32 64, %s24
        %p276 = scmp.lt.s32.totalorder %s275, 127
        %s277 = scalar_select %p276, %s275, 127
        %s278 = smul.addr %s277, 4
        %s279 = scalar_lea.vmem %s1, %s278
        %s280 = smul.u32 64, %s24
        %s281 = smul.u32 32, %s23
        %p282 = scmp.lt.s32.totalorder %s281, 127
        %s283 = scalar_select %p282, %s281, 127
        %s284 = smul.addr %s283, 4
        %s285 = scalar_lea.vmem %s4, %s284
        %s286 = smul.u32 32, %s23
        %p288 = scmp.eq.s32.totalorder %s24, 0
        // Predicated region
        $region49: #{tpu_custom_call.1} parent=35 // pred_check
          %p289 = pneg %p288
        $region50: #{tpu_custom_call.1} parent=35 // pred_check_branch
          %291 = sbr.rel (%p289) target = $region52
        $region51: #{tpu_custom_call.1} parent=35 // pred_region
          %vm292 = vcmask 261120
          %293 = vst.msk [vmem:[#allocation2] sm:$0xff] %vm292, 0.0
          %294 = vst.msk [vmem:[#allocation2 + $0x8] sm:$0xff] %vm292, 0.0
          %295 = vst.msk [vmem:[#allocation2 + $0x10] sm:$0xff] %vm292, 0.0
          %296 = vst.msk [vmem:[#allocation2 + $0x18] sm:$0xff] %vm292, 0.0
          %297 = vst.msk [vmem:[#allocation2 + $0x20] sm:$0xff] %vm292, 0.0
          %298 = vst.msk [vmem:[#allocation2 + $0x28] sm:$0xff] %vm292, 0.0
          %299 = vst.msk [vmem:[#allocation2 + $0x30] sm:$0xff] %vm292, 0.0
          %300 = vst.msk [vmem:[#allocation2 + $0x38] sm:$0xff] %vm292, 0.0
          %301 = vst.msk [vmem:[#allocation2 + $0x40] sm:$0xff] %vm292, 0.0
          %302 = vst.msk [vmem:[#allocation2 + $0x48] sm:$0xff] %vm292, 0.0
          %303 = vst.msk [vmem:[#allocation2 + $0x50] sm:$0xff] %vm292, 0.0
          %304 = vst.msk [vmem:[#allocation2 + $0x58] sm:$0xff] %vm292, 0.0
          %305 = vst.msk [vmem:[#allocation2 + $0x60] sm:$0xff] %vm292, 0.0
          %306 = vst.msk [vmem:[#allocation2 + $0x68] sm:$0xff] %vm292, 0.0
          %307 = vst.msk [vmem:[#allocation2 + $0x70] sm:$0xff] %vm292, 0.0
          %308 = vst.msk [vmem:[#allocation2 + $0x78] sm:$0xff] %vm292, 0.0
          %309 = vst.msk [vmem:[#allocation2 + $0x80] sm:$0xff] %vm292, 0.0
          %310 = vst.msk [vmem:[#allocation2 + $0x88] sm:$0xff] %vm292, 0.0
          %311 = vst.msk [vmem:[#allocation2 + $0x90] sm:$0xff] %vm292, 0.0
          %312 = vst.msk [vmem:[#allocation2 + $0x98] sm:$0xff] %vm292, 0.0
          %313 = vst.msk [vmem:[#allocation2 + $0xa0] sm:$0xff] %vm292, 0.0
          %314 = vst.msk [vmem:[#allocation2 + $0xa8] sm:$0xff] %vm292, 0.0
          %315 = vst.msk [vmem:[#allocation2 + $0xb0] sm:$0xff] %vm292, 0.0
          %316 = vst.msk [vmem:[#allocation2 + $0xb8] sm:$0xff] %vm292, 0.0
          %317 = vst.msk [vmem:[#allocation2 + $0xc0] sm:$0xff] %vm292, 0.0
          %318 = vst.msk [vmem:[#allocation2 + $0xc8] sm:$0xff] %vm292, 0.0
          %319 = vst.msk [vmem:[#allocation2 + $0xd0] sm:$0xff] %vm292, 0.0
          %320 = vst.msk [vmem:[#allocation2 + $0xd8] sm:$0xff] %vm292, 0.0
          %321 = vst.msk [vmem:[#allocation2 + $0xe0] sm:$0xff] %vm292, 0.0
          %322 = vst.msk [vmem:[#allocation2 + $0xe8] sm:$0xff] %vm292, 0.0
          %323 = vst.msk [vmem:[#allocation2 + $0xf0] sm:$0xff] %vm292, 0.0
          %324 = vst.msk [vmem:[#allocation2 + $0xf8] sm:$0xff] %vm292, 0.0
        $region52: #{tpu_custom_call.1} parent=35 // pred_fallthru
          _
        %v325 = vld [vmem:[#allocation2] sm:$0xff]
        %v326 = vld [vmem:[#allocation2 + $0x8] sm:$0xff]
        %v327 = vld [vmem:[#allocation2 + $0x10] sm:$0xff]
        %v328 = vld [vmem:[#allocation2 + $0x18] sm:$0xff]
        %v329 = vld [vmem:[#allocation2 + $0x20] sm:$0xff]
        %v330 = vld [vmem:[#allocation2 + $0x28] sm:$0xff]
        %v331 = vld [vmem:[#allocation2 + $0x30] sm:$0xff]
        %v332 = vld [vmem:[#allocation2 + $0x38] sm:$0xff]
        %v333 = vld [vmem:[#allocation2 + $0x40] sm:$0xff]
        %v334 = vld [vmem:[#allocation2 + $0x48] sm:$0xff]
        %v335 = vld [vmem:[#allocation2 + $0x50] sm:$0xff]
        %v336 = vld [vmem:[#allocation2 + $0x58] sm:$0xff]
        %v337 = vld [vmem:[#allocation2 + $0x60] sm:$0xff]
        %v338 = vld [vmem:[#allocation2 + $0x68] sm:$0xff]
        %v339 = vld [vmem:[#allocation2 + $0x70] sm:$0xff]
        %v340 = vld [vmem:[#allocation2 + $0x78] sm:$0xff]
        %v341 = vld [vmem:[#allocation2 + $0x80] sm:$0xff]
        %v342 = vld [vmem:[#allocation2 + $0x88] sm:$0xff]
        %v343 = vld [vmem:[#allocation2 + $0x90] sm:$0xff]
        %v344 = vld [vmem:[#allocation2 + $0x98] sm:$0xff]
        %v345 = vld [vmem:[#allocation2 + $0xa0] sm:$0xff]
        %v346 = vld [vmem:[#allocation2 + $0xa8] sm:$0xff]
        %v347 = vld [vmem:[#allocation2 + $0xb0] sm:$0xff]
        %v348 = vld [vmem:[#allocation2 + $0xb8] sm:$0xff]
        %v349 = vld [vmem:[#allocation2 + $0xc0] sm:$0xff]
        %v350 = vld [vmem:[#allocation2 + $0xc8] sm:$0xff]
        %v351 = vld [vmem:[#allocation2 + $0xd0] sm:$0xff]
        %v352 = vld [vmem:[#allocation2 + $0xd8] sm:$0xff]
        %v353 = vld [vmem:[#allocation2 + $0xe0] sm:$0xff]
        %v354 = vld [vmem:[#allocation2 + $0xe8] sm:$0xff]
        %v355 = vld [vmem:[#allocation2 + $0xf0] sm:$0xff]
        %v356 = vld [vmem:[#allocation2 + $0xf8] sm:$0xff]
        %v357 = vld [vmem:[%s235] sm:$0xff]
        %v358 = vld [vmem:[%s235 + $0x8] sm:$0xff]
        %v359 = vld [vmem:[%s235 + $0x10] sm:$0xff]
        %v360 = vld [vmem:[%s235 + $0x18] sm:$0xff]
        %v361 = vld [vmem:[%s235 + $0x20] sm:$0xff]
        %v362 = vld [vmem:[%s235 + $0x28] sm:$0xff]
        %v363 = vld [vmem:[%s235 + $0x30] sm:$0xff]
        %v364 = vld [vmem:[%s235 + $0x38] sm:$0xff]
        %v365 = vld [vmem:[%s235 + $0x40] sm:$0xff]
        %v366 = vld [vmem:[%s235 + $0x48] sm:$0xff]
        %v367 = vld [vmem:[%s235 + $0x50] sm:$0xff]
        %v368 = vld [vmem:[%s235 + $0x58] sm:$0xff]
        %v369 = vld [vmem:[%s235 + $0x60] sm:$0xff]
        %v370 = vld [vmem:[%s235 + $0x68] sm:$0xff]
        %v371 = vld [vmem:[%s235 + $0x70] sm:$0xff]
        %v372 = vld [vmem:[%s235 + $0x78] sm:$0xff]
        %v373 = vld [vmem:[%s235 + $0x80] sm:$0xff]
        %v374 = vld [vmem:[%s235 + $0x88] sm:$0xff]
        %v375 = vld [vmem:[%s235 + $0x90] sm:$0xff]
        %v376 = vld [vmem:[%s235 + $0x98] sm:$0xff]
        %v377 = vld [vmem:[%s235 + $0xa0] sm:$0xff]
        %v378 = vld [vmem:[%s235 + $0xa8] sm:$0xff]
        %v379 = vld [vmem:[%s235 + $0xb0] sm:$0xff]
        %v380 = vld [vmem:[%s235 + $0xb8] sm:$0xff]
        %v381 = vld [vmem:[%s235 + $0xc0] sm:$0xff]
        %v382 = vld [vmem:[%s235 + $0xc8] sm:$0xff]
        %v383 = vld [vmem:[%s235 + $0xd0] sm:$0xff]
        %v384 = vld [vmem:[%s235 + $0xd8] sm:$0xff]
        %v385 = vld [vmem:[%s235 + $0xe0] sm:$0xff]
        %v386 = vld [vmem:[%s235 + $0xe8] sm:$0xff]
        %v387 = vld [vmem:[%s235 + $0xf0] sm:$0xff]
        %v388 = vld [vmem:[%s235 + $0xf8] sm:$0xff]
        %v389 = vld [vmem:[%s235 + $0x100] sm:$0xff]
        %v390 = vld [vmem:[%s235 + $0x108] sm:$0xff]
        %v391 = vld [vmem:[%s235 + $0x110] sm:$0xff]
        %v392 = vld [vmem:[%s235 + $0x118] sm:$0xff]
        %v393 = vld [vmem:[%s235 + $0x120] sm:$0xff]
        %v394 = vld [vmem:[%s235 + $0x128] sm:$0xff]
        %v395 = vld [vmem:[%s235 + $0x130] sm:$0xff]
        %v396 = vld [vmem:[%s235 + $0x138] sm:$0xff]
        %v397 = vld [vmem:[%s235 + $0x140] sm:$0xff]
        %v398 = vld [vmem:[%s235 + $0x148] sm:$0xff]
        %v399 = vld [vmem:[%s235 + $0x150] sm:$0xff]
        %v400 = vld [vmem:[%s235 + $0x158] sm:$0xff]
        %v401 = vld [vmem:[%s235 + $0x160] sm:$0xff]
        %v402 = vld [vmem:[%s235 + $0x168] sm:$0xff]
        %v403 = vld [vmem:[%s235 + $0x170] sm:$0xff]
        %v404 = vld [vmem:[%s235 + $0x178] sm:$0xff]
        %v405 = vld [vmem:[%s235 + $0x180] sm:$0xff]
        %v406 = vld [vmem:[%s235 + $0x188] sm:$0xff]
        %v407 = vld [vmem:[%s235 + $0x190] sm:$0xff]
        %v408 = vld [vmem:[%s235 + $0x198] sm:$0xff]
        %v409 = vld [vmem:[%s235 + $0x1a0] sm:$0xff]
        %v410 = vld [vmem:[%s235 + $0x1a8] sm:$0xff]
        %v411 = vld [vmem:[%s235 + $0x1b0] sm:$0xff]
        %v412 = vld [vmem:[%s235 + $0x1b8] sm:$0xff]
        %v413 = vld [vmem:[%s235 + $0x1c0] sm:$0xff]
        %v414 = vld [vmem:[%s235 + $0x1c8] sm:$0xff]
        %v415 = vld [vmem:[%s235 + $0x1d0] sm:$0xff]
        %v416 = vld [vmem:[%s235 + $0x1d8] sm:$0xff]
        %v417 = vld [vmem:[%s235 + $0x1e0] sm:$0xff]
        %v418 = vld [vmem:[%s235 + $0x1e8] sm:$0xff]
        %v419 = vld [vmem:[%s235 + $0x1f0] sm:$0xff]
        %v420 = vld [vmem:[%s235 + $0x1f8] sm:$0xff]
        %v421 = vld [vmem:[%s279] sm:$0xf]
        %v422 = vld [vmem:[%s279 + $0x4] sm:$0xf]
        %v423 = vld [vmem:[%s279 + $0x8] sm:$0xf]
        %v424 = vld [vmem:[%s279 + $0xc] sm:$0xf]
        %v425 = vld [vmem:[%s279 + $0x10] sm:$0xf]
        %v426 = vld [vmem:[%s279 + $0x14] sm:$0xf]
        %v427 = vld [vmem:[%s279 + $0x18] sm:$0xf]
        %v428 = vld [vmem:[%s279 + $0x1c] sm:$0xf]
        %v429 = vld [vmem:[%s279 + $0x20] sm:$0xf]
        %v430 = vld [vmem:[%s279 + $0x24] sm:$0xf]
        %v431 = vld [vmem:[%s279 + $0x28] sm:$0xf]
        %v432 = vld [vmem:[%s279 + $0x2c] sm:$0xf]
        %v433 = vld [vmem:[%s279 + $0x30] sm:$0xf]
        %v434 = vld [vmem:[%s279 + $0x34] sm:$0xf]
        %v435 = vld [vmem:[%s279 + $0x38] sm:$0xf]
        %v436 = vld [vmem:[%s279 + $0x3c] sm:$0xf]
        %v437 = vld [vmem:[%s279 + $0x40] sm:$0xf]
        %v438 = vld [vmem:[%s279 + $0x44] sm:$0xf]
        %v439 = vld [vmem:[%s279 + $0x48] sm:$0xf]
        %v440 = vld [vmem:[%s279 + $0x4c] sm:$0xf]
        %v441 = vld [vmem:[%s279 + $0x50] sm:$0xf]
        %v442 = vld [vmem:[%s279 + $0x54] sm:$0xf]
        %v443 = vld [vmem:[%s279 + $0x58] sm:$0xf]
        %v444 = vld [vmem:[%s279 + $0x5c] sm:$0xf]
        %v445 = vld [vmem:[%s279 + $0x60] sm:$0xf]
        %v446 = vld [vmem:[%s279 + $0x64] sm:$0xf]
        %v447 = vld [vmem:[%s279 + $0x68] sm:$0xf]
        %v448 = vld [vmem:[%s279 + $0x6c] sm:$0xf]
        %v449 = vld [vmem:[%s279 + $0x70] sm:$0xf]
        %v450 = vld [vmem:[%s279 + $0x74] sm:$0xf]
        %v451 = vld [vmem:[%s279 + $0x78] sm:$0xf]
        %v452 = vld [vmem:[%s279 + $0x7c] sm:$0xf]
        %v453 = vld [vmem:[%s279 + $0x80] sm:$0xf]
        %v454 = vld [vmem:[%s279 + $0x84] sm:$0xf]
        %v455 = vld [vmem:[%s279 + $0x88] sm:$0xf]
        %v456 = vld [vmem:[%s279 + $0x8c] sm:$0xf]
        %v457 = vld [vmem:[%s279 + $0x90] sm:$0xf]
        %v458 = vld [vmem:[%s279 + $0x94] sm:$0xf]
        %v459 = vld [vmem:[%s279 + $0x98] sm:$0xf]
        %v460 = vld [vmem:[%s279 + $0x9c] sm:$0xf]
        %v461 = vld [vmem:[%s279 + $0xa0] sm:$0xf]
        %v462 = vld [vmem:[%s279 + $0xa4] sm:$0xf]
        %v463 = vld [vmem:[%s279 + $0xa8] sm:$0xf]
        %v464 = vld [vmem:[%s279 + $0xac] sm:$0xf]
        %v465 = vld [vmem:[%s279 + $0xb0] sm:$0xf]
        %v466 = vld [vmem:[%s279 + $0xb4] sm:$0xf]
        %v467 = vld [vmem:[%s279 + $0xb8] sm:$0xf]
        %v468 = vld [vmem:[%s279 + $0xbc] sm:$0xf]
        %v469 = vld [vmem:[%s279 + $0xc0] sm:$0xf]
        %v470 = vld [vmem:[%s279 + $0xc4] sm:$0xf]
        %v471 = vld [vmem:[%s279 + $0xc8] sm:$0xf]
        %v472 = vld [vmem:[%s279 + $0xcc] sm:$0xf]
        %v473 = vld [vmem:[%s279 + $0xd0] sm:$0xf]
        %v474 = vld [vmem:[%s279 + $0xd4] sm:$0xf]
        %v475 = vld [vmem:[%s279 + $0xd8] sm:$0xf]
        %v476 = vld [vmem:[%s279 + $0xdc] sm:$0xf]
        %v477 = vld [vmem:[%s279 + $0xe0] sm:$0xf]
        %v478 = vld [vmem:[%s279 + $0xe4] sm:$0xf]
        %v479 = vld [vmem:[%s279 + $0xe8] sm:$0xf]
        %v480 = vld [vmem:[%s279 + $0xec] sm:$0xf]
        %v481 = vld [vmem:[%s279 + $0xf0] sm:$0xf]
        %v482 = vld [vmem:[%s279 + $0xf4] sm:$0xf]
        %v483 = vld [vmem:[%s279 + $0xf8] sm:$0xf]
        %v484 = vld [vmem:[%s279 + $0xfc] sm:$0xf]
        %v549 = vunpack.c.l.b16 %v357
        %v550 = vunpack.c.h.b16 %v357
        %v551 = vunpack.c.l.b16 %v358
        %v552 = vunpack.c.h.b16 %v358
        %v553 = vunpack.c.l.b16 %v359
        %v554 = vunpack.c.h.b16 %v359
        %v555 = vunpack.c.l.b16 %v360
        %v556 = vunpack.c.h.b16 %v360
        %v557 = vunpack.c.l.b16 %v361
        %v558 = vunpack.c.h.b16 %v361
        %v559 = vunpack.c.l.b16 %v362
        %v560 = vunpack.c.h.b16 %v362
        %v561 = vunpack.c.l.b16 %v363
        %v562 = vunpack.c.h.b16 %v363
        %v563 = vunpack.c.l.b16 %v364
        %v564 = vunpack.c.h.b16 %v364
        %v565 = vunpack.c.l.b16 %v365
        %v566 = vunpack.c.h.b16 %v365
        %v567 = vunpack.c.l.b16 %v366
        %v568 = vunpack.c.h.b16 %v366
        %v569 = vunpack.c.l.b16 %v367
        %v570 = vunpack.c.h.b16 %v367
        %v571 = vunpack.c.l.b16 %v368
        %v572 = vunpack.c.h.b16 %v368
        %v573 = vunpack.c.l.b16 %v369
        %v574 = vunpack.c.h.b16 %v369
        %v575 = vunpack.c.l.b16 %v370
        %v576 = vunpack.c.h.b16 %v370
        %v577 = vunpack.c.l.b16 %v371
        %v578 = vunpack.c.h.b16 %v371
        %v579 = vunpack.c.l.b16 %v372
        %v580 = vunpack.c.h.b16 %v372
        %v581 = vunpack.c.l.b16 %v373
        %v582 = vunpack.c.h.b16 %v373
        %v583 = vunpack.c.l.b16 %v374
        %v584 = vunpack.c.h.b16 %v374
        %v585 = vunpack.c.l.b16 %v375
        %v586 = vunpack.c.h.b16 %v375
        %v587 = vunpack.c.l.b16 %v376
        %v588 = vunpack.c.h.b16 %v376
        %v589 = vunpack.c.l.b16 %v377
        %v590 = vunpack.c.h.b16 %v377
        %v591 = vunpack.c.l.b16 %v378
        %v592 = vunpack.c.h.b16 %v378
        %v593 = vunpack.c.l.b16 %v379
        %v594 = vunpack.c.h.b16 %v379
        %v595 = vunpack.c.l.b16 %v380
        %v596 = vunpack.c.h.b16 %v380
        %v597 = vunpack.c.l.b16 %v381
        %v598 = vunpack.c.h.b16 %v381
        %v599 = vunpack.c.l.b16 %v382
        %v600 = vunpack.c.h.b16 %v382
        %v601 = vunpack.c.l.b16 %v383
        %v602 = vunpack.c.h.b16 %v383
        %v603 = vunpack.c.l.b16 %v384
        %v604 = vunpack.c.h.b16 %v384
        %v605 = vunpack.c.l.b16 %v385
        %v606 = vunpack.c.h.b16 %v385
        %v607 = vunpack.c.l.b16 %v386
        %v608 = vunpack.c.h.b16 %v386
        %v609 = vunpack.c.l.b16 %v387
        %v610 = vunpack.c.h.b16 %v387
        %v611 = vunpack.c.l.b16 %v388
        %v612 = vunpack.c.h.b16 %v388
        %v613 = vunpack.c.l.b16 %v389
        %v614 = vunpack.c.h.b16 %v389
        %v615 = vunpack.c.l.b16 %v390
        %v616 = vunpack.c.h.b16 %v390
        %v617 = vunpack.c.l.b16 %v391
        %v618 = vunpack.c.h.b16 %v391
        %v619 = vunpack.c.l.b16 %v392
        %v620 = vunpack.c.h.b16 %v392
        %v621 = vunpack.c.l.b16 %v393
        %v622 = vunpack.c.h.b16 %v393
        %v623 = vunpack.c.l.b16 %v394
        %v624 = vunpack.c.h.b16 %v394
        %v625 = vunpack.c.l.b16 %v395
        %v626 = vunpack.c.h.b16 %v395
        %v627 = vunpack.c.l.b16 %v396
        %v628 = vunpack.c.h.b16 %v396
        %v629 = vunpack.c.l.b16 %v397
        %v630 = vunpack.c.h.b16 %v397
        %v631 = vunpack.c.l.b16 %v398
        %v632 = vunpack.c.h.b16 %v398
        %v633 = vunpack.c.l.b16 %v399
        %v634 = vunpack.c.h.b16 %v399
        %v635 = vunpack.c.l.b16 %v400
        %v636 = vunpack.c.h.b16 %v400
        %v637 = vunpack.c.l.b16 %v401
        %v638 = vunpack.c.h.b16 %v401
        %v639 = vunpack.c.l.b16 %v402
        %v640 = vunpack.c.h.b16 %v402
        %v641 = vunpack.c.l.b16 %v403
        %v642 = vunpack.c.h.b16 %v403
        %v643 = vunpack.c.l.b16 %v404
        %v644 = vunpack.c.h.b16 %v404
        %v645 = vunpack.c.l.b16 %v405
        %v646 = vunpack.c.h.b16 %v405
        %v647 = vunpack.c.l.b16 %v406
        %v648 = vunpack.c.h.b16 %v406
        %v649 = vunpack.c.l.b16 %v407
        %v650 = vunpack.c.h.b16 %v407
        %v651 = vunpack.c.l.b16 %v408
        %v652 = vunpack.c.h.b16 %v408
        %v653 = vunpack.c.l.b16 %v409
        %v654 = vunpack.c.h.b16 %v409
        %v655 = vunpack.c.l.b16 %v410
        %v656 = vunpack.c.h.b16 %v410
        %v657 = vunpack.c.l.b16 %v411
        %v658 = vunpack.c.h.b16 %v411
        %v659 = vunpack.c.l.b16 %v412
        %v660 = vunpack.c.h.b16 %v412
        %v661 = vunpack.c.l.b16 %v413
        %v662 = vunpack.c.h.b16 %v413
        %v663 = vunpack.c.l.b16 %v414
        %v664 = vunpack.c.h.b16 %v414
        %v665 = vunpack.c.l.b16 %v415
        %v666 = vunpack.c.h.b16 %v415
        %v667 = vunpack.c.l.b16 %v416
        %v668 = vunpack.c.h.b16 %v416
        %v669 = vunpack.c.l.b16 %v417
        %v670 = vunpack.c.h.b16 %v417
        %v671 = vunpack.c.l.b16 %v418
        %v672 = vunpack.c.h.b16 %v418
        %v673 = vunpack.c.l.b16 %v419
        %v674 = vunpack.c.h.b16 %v419
        %v675 = vunpack.c.l.b16 %v420
        %v676 = vunpack.c.h.b16 %v420
        %v677 = vpack.c.b16 %v553, %v549
        %v678 = vpack.c.b16 %v554, %v550
        %v679 = vpack.c.b16 %v555, %v551
        %v680 = vpack.c.b16 %v556, %v552
        %v681 = vpack.c.b16 %v561, %v557
        %v682 = vpack.c.b16 %v562, %v558
        %v683 = vpack.c.b16 %v563, %v559
        %v684 = vpack.c.b16 %v564, %v560
        %v685 = vpack.c.b16 %v569, %v565
        %v686 = vpack.c.b16 %v570, %v566
        %v687 = vpack.c.b16 %v571, %v567
        %v688 = vpack.c.b16 %v572, %v568
        %v689 = vpack.c.b16 %v577, %v573
        %v690 = vpack.c.b16 %v578, %v574
        %v691 = vpack.c.b16 %v579, %v575
        %v692 = vpack.c.b16 %v580, %v576
        %v693 = vpack.c.b16 %v585, %v581
        %v694 = vpack.c.b16 %v586, %v582
        %v695 = vpack.c.b16 %v587, %v583
        %v696 = vpack.c.b16 %v588, %v584
        %v697 = vpack.c.b16 %v593, %v589
        %v698 = vpack.c.b16 %v594, %v590
        %v699 = vpack.c.b16 %v595, %v591
        %v700 = vpack.c.b16 %v596, %v592
        %v701 = vpack.c.b16 %v601, %v597
        %v702 = vpack.c.b16 %v602, %v598
        %v703 = vpack.c.b16 %v603, %v599
        %v704 = vpack.c.b16 %v604, %v600
        %v705 = vpack.c.b16 %v609, %v605
        %v706 = vpack.c.b16 %v610, %v606
        %v707 = vpack.c.b16 %v611, %v607
        %v708 = vpack.c.b16 %v612, %v608
        %v709 = vpack.c.b16 %v617, %v613
        %v710 = vpack.c.b16 %v618, %v614
        %v711 = vpack.c.b16 %v619, %v615
        %v712 = vpack.c.b16 %v620, %v616
        %v713 = vpack.c.b16 %v625, %v621
        %v714 = vpack.c.b16 %v626, %v622
        %v715 = vpack.c.b16 %v627, %v623
        %v716 = vpack.c.b16 %v628, %v624
        %v717 = vpack.c.b16 %v633, %v629
        %v718 = vpack.c.b16 %v634, %v630
        %v719 = vpack.c.b16 %v635, %v631
        %v720 = vpack.c.b16 %v636, %v632
        %v721 = vpack.c.b16 %v641, %v637
        %v722 = vpack.c.b16 %v642, %v638
        %v723 = vpack.c.b16 %v643, %v639
        %v724 = vpack.c.b16 %v644, %v640
        %v725 = vpack.c.b16 %v649, %v645
        %v726 = vpack.c.b16 %v650, %v646
        %v727 = vpack.c.b16 %v651, %v647
        %v728 = vpack.c.b16 %v652, %v648
        %v729 = vpack.c.b16 %v657, %v653
        %v730 = vpack.c.b16 %v658, %v654
        %v731 = vpack.c.b16 %v659, %v655
        %v732 = vpack.c.b16 %v660, %v656
        %v733 = vpack.c.b16 %v665, %v661
        %v734 = vpack.c.b16 %v666, %v662
        %v735 = vpack.c.b16 %v667, %v663
        %v736 = vpack.c.b16 %v668, %v664
        %v737 = vpack.c.b16 %v673, %v669
        %v738 = vpack.c.b16 %v674, %v670
        %v739 = vpack.c.b16 %v675, %v671
        %v740 = vpack.c.b16 %v676, %v672
        %v869 = vunpack.c.l.b16 %v421
        %v870 = vunpack.c.l.b16 %v422
        %v871 = vunpack.c.l.b16 %v423
        %v872 = vunpack.c.l.b16 %v424
        %v873 = vunpack.c.l.b16 %v425
        %v874 = vunpack.c.l.b16 %v426
        %v875 = vunpack.c.l.b16 %v427
        %v876 = vunpack.c.l.b16 %v428
        %v877 = vunpack.c.l.b16 %v429
        %v878 = vunpack.c.l.b16 %v430
        %v879 = vunpack.c.l.b16 %v431
        %v880 = vunpack.c.l.b16 %v432
        %v881 = vunpack.c.l.b16 %v433
        %v882 = vunpack.c.l.b16 %v434
        %v883 = vunpack.c.l.b16 %v435
        %v884 = vunpack.c.l.b16 %v436
        %v885 = vunpack.c.l.b16 %v437
        %v886 = vunpack.c.l.b16 %v438
        %v887 = vunpack.c.l.b16 %v439
        %v888 = vunpack.c.l.b16 %v440
        %v889 = vunpack.c.l.b16 %v441
        %v890 = vunpack.c.l.b16 %v442
        %v891 = vunpack.c.l.b16 %v443
        %v892 = vunpack.c.l.b16 %v444
        %v893 = vunpack.c.l.b16 %v445
        %v894 = vunpack.c.l.b16 %v446
        %v895 = vunpack.c.l.b16 %v447
        %v896 = vunpack.c.l.b16 %v448
        %v897 = vunpack.c.l.b16 %v449
        %v898 = vunpack.c.l.b16 %v450
        %v899 = vunpack.c.l.b16 %v451
        %v900 = vunpack.c.l.b16 %v452
        %v901 = vunpack.c.l.b16 %v453
        %v902 = vunpack.c.l.b16 %v454
        %v903 = vunpack.c.l.b16 %v455
        %v904 = vunpack.c.l.b16 %v456
        %v905 = vunpack.c.l.b16 %v457
        %v906 = vunpack.c.l.b16 %v458
        %v907 = vunpack.c.l.b16 %v459
        %v908 = vunpack.c.l.b16 %v460
        %v909 = vunpack.c.l.b16 %v461
        %v910 = vunpack.c.l.b16 %v462
        %v911 = vunpack.c.l.b16 %v463
        %v912 = vunpack.c.l.b16 %v464
        %v913 = vunpack.c.l.b16 %v465
        %v914 = vunpack.c.l.b16 %v466
        %v915 = vunpack.c.l.b16 %v467
        %v916 = vunpack.c.l.b16 %v468
        %v917 = vunpack.c.l.b16 %v469
        %v918 = vunpack.c.l.b16 %v470
        %v919 = vunpack.c.l.b16 %v471
        %v920 = vunpack.c.l.b16 %v472
        %v921 = vunpack.c.l.b16 %v473
        %v922 = vunpack.c.l.b16 %v474
        %v923 = vunpack.c.l.b16 %v475
        %v924 = vunpack.c.l.b16 %v476
        %v925 = vunpack.c.l.b16 %v477
        %v926 = vunpack.c.l.b16 %v478
        %v927 = vunpack.c.l.b16 %v479
        %v928 = vunpack.c.l.b16 %v480
        %v929 = vunpack.c.l.b16 %v481
        %v930 = vunpack.c.l.b16 %v482
        %v931 = vunpack.c.l.b16 %v483
        %v932 = vunpack.c.l.b16 %v484
        %v933 = vpack.c.b16 %v870, %v869
        %v934 = vpack.c.b16 %v872, %v871
        %v935 = vpack.c.b16 %v874, %v873
        %v936 = vpack.c.b16 %v876, %v875
        %v937 = vpack.c.b16 %v878, %v877
        %v938 = vpack.c.b16 %v880, %v879
        %v939 = vpack.c.b16 %v882, %v881
        %v940 = vpack.c.b16 %v884, %v883
        %v941 = vpack.c.b16 %v886, %v885
        %v942 = vpack.c.b16 %v888, %v887
        %v943 = vpack.c.b16 %v890, %v889
        %v944 = vpack.c.b16 %v892, %v891
        %v945 = vpack.c.b16 %v894, %v893
        %v946 = vpack.c.b16 %v896, %v895
        %v947 = vpack.c.b16 %v898, %v897
        %v948 = vpack.c.b16 %v900, %v899
        %v949 = vpack.c.b16 %v902, %v901
        %v950 = vpack.c.b16 %v904, %v903
        %v951 = vpack.c.b16 %v906, %v905
        %v952 = vpack.c.b16 %v908, %v907
        %v953 = vpack.c.b16 %v910, %v909
        %v954 = vpack.c.b16 %v912, %v911
        %v955 = vpack.c.b16 %v914, %v913
        %v956 = vpack.c.b16 %v916, %v915
        %v957 = vpack.c.b16 %v918, %v917
        %v958 = vpack.c.b16 %v920, %v919
        %v959 = vpack.c.b16 %v922, %v921
        %v960 = vpack.c.b16 %v924, %v923
        %v961 = vpack.c.b16 %v926, %v925
        %v962 = vpack.c.b16 %v928, %v927
        %v963 = vpack.c.b16 %v930, %v929
        %v964 = vpack.c.b16 %v932, %v931
        %997 = vmatprep.subr.bf16.mxu0 0
        %998 = vmatpush1.bf16.msra.mxu0 %v933
        %999 = vmatprep.subr.bf16.mxu0 0
        %1000 = vmatpush1.bf16.msra.mxu0 %v934
        %1001 = vmatprep.subr.bf16.mxu0 0
        %1002 = vmatpush1.bf16.msra.mxu0 %v935
        %1003 = vmatprep.subr.bf16.mxu0 0
        %1004 = vmatpush1.bf16.msra.mxu0 %v936
        %1005 = vmatprep.subr.bf16.mxu0 0
        %1006 = vmatpush1.bf16.msra.mxu0 %v937
        %1007 = vmatprep.subr.bf16.mxu0 0
        %1008 = vmatpush1.bf16.msra.mxu0 %v938
        %1009 = vmatprep.subr.bf16.mxu0 0
        %1010 = vmatpush1.bf16.msra.mxu0 %v939
        %1011 = vmatprep.subr.bf16.mxu0 0
        %1012 = vmatpush1.bf16.msra.mxu0 %v940
        %1013 = vmatprep.subr.bf16.mxu0 0
        %1014 = vmatpush1.bf16.msra.mxu0 %v941
        %1015 = vmatprep.subr.bf16.mxu0 0
        %1016 = vmatpush1.bf16.msra.mxu0 %v942
        %1017 = vmatprep.subr.bf16.mxu0 0
        %1018 = vmatpush1.bf16.msra.mxu0 %v943
        %1019 = vmatprep.subr.bf16.mxu0 0
        %1020 = vmatpush1.bf16.msra.mxu0 %v944
        %1021 = vmatprep.subr.bf16.mxu0 0
        %1022 = vmatpush1.bf16.msra.mxu0 %v945
        %1023 = vmatprep.subr.bf16.mxu0 0
        %1024 = vmatpush1.bf16.msra.mxu0 %v946
        %1025 = vmatprep.subr.bf16.mxu0 0
        %1026 = vmatpush1.bf16.msra.mxu0 %v947
        %1027 = vmatprep.subr.bf16.mxu0 0
        %1028 = vmatpush1.bf16.msra.mxu0 %v948
        %1029 = vmatprep.mubr.bf16.mxu0 %v678
        %1030 = vmatmul.mubr.bf16.gmra.mrb[0].mxu0 %v677
        %v1031 = vpop.f32.mrb[0].mxu0
        %v1032 = vadd.f32 0.0, %v1031
        %v1033 = vpop.f32.mrb[0].mxu0
        %v1034 = vpop.f32.mrb[0].mxu0
        %v1035 = vadd.f32 0.0, %v1034
        %v1036 = vpop.f32.mrb[0].mxu0
        %1037 = vmatprep.mubr.bf16.mxu0 %v682
        %1038 = vmatmul.mubr.bf16.gmra.mrb[0].mxu0 %v681
        %v1039 = vpop.f32.mrb[0].mxu0
        %v1040 = vadd.f32 0.0, %v1039
        %v1041 = vpop.f32.mrb[0].mxu0
        %v1042 = vpop.f32.mrb[0].mxu0
        %v1043 = vadd.f32 0.0, %v1042
        %v1044 = vpop.f32.mrb[0].mxu0
        %1045 = vmatprep.mubr.bf16.mxu0 %v686
        %1046 = vmatmul.mubr.bf16.gmra.mrb[0].mxu0 %v685
        %v1047 = vpop.f32.mrb[0].mxu0
        %v1048 = vadd.f32 0.0, %v1047
        %v1049 = vpop.f32.mrb[0].mxu0
        %v1050 = vpop.f32.mrb[0].mxu0
        %v1051 = vadd.f32 0.0, %v1050
        %v1052 = vpop.f32.mrb[0].mxu0
        %1053 = vmatprep.mubr.bf16.mxu0 %v690
        %1054 = vmatmul.mubr.bf16.gmra.mrb[0].mxu0 %v689
        %v1055 = vpop.f32.mrb[0].mxu0
        %v1056 = vadd.f32 0.0, %v1055
        %v1057 = vpop.f32.mrb[0].mxu0
        %v1058 = vpop.f32.mrb[0].mxu0
        %v1059 = vadd.f32 0.0, %v1058
        %v1060 = vpop.f32.mrb[0].mxu0
        %1061 = vmatprep.mubr.bf16.mxu0 %v694
        %1062 = vmatmul.mubr.bf16.gmra.mrb[0].mxu0 %v693
        %v1063 = vpop.f32.mrb[0].mxu0
        %v1064 = vadd.f32 0.0, %v1063
        %v1065 = vpop.f32.mrb[0].mxu0
        %v1066 = vpop.f32.mrb[0].mxu0
        %v1067 = vadd.f32 0.0, %v1066
        %v1068 = vpop.f32.mrb[0].mxu0
        %1069 = vmatprep.mubr.bf16.mxu0 %v698
        %1070 = vmatmul.mubr.bf16.gmra.mrb[0].mxu0 %v697
        %v1071 = vpop.f32.mrb[0].mxu0
        %v1072 = vadd.f32 0.0, %v1071
        %v1073 = vpop.f32.mrb[0].mxu0
        %v1074 = vpop.f32.mrb[0].mxu0
        %v1075 = vadd.f32 0.0, %v1074
        %v1076 = vpop.f32.mrb[0].mxu0
        %1077 = vmatprep.mubr.bf16.mxu0 %v702
        %1078 = vmatmul.mubr.bf16.gmra.mrb[0].mxu0 %v701
        %v1079 = vpop.f32.mrb[0].mxu0
        %v1080 = vadd.f32 0.0, %v1079
        %v1081 = vpop.f32.mrb[0].mxu0
        %v1082 = vpop.f32.mrb[0].mxu0
        %v1083 = vadd.f32 0.0, %v1082
        %v1084 = vpop.f32.mrb[0].mxu0
        %1085 = vmatprep.mubr.bf16.mxu0 %v706
        %1086 = vmatmul.mubr.bf16.gmra.mrb[0].mxu0 %v705
        %v1087 = vpop.f32.mrb[0].mxu0
        %v1088 = vadd.f32 0.0, %v1087
        %v1089 = vpop.f32.mrb[0].mxu0
        %v1090 = vpop.f32.mrb[0].mxu0
        %v1091 = vadd.f32 0.0, %v1090
        %v1092 = vpop.f32.mrb[0].mxu0
        %1093 = vmatprep.mubr.bf16.mxu0 %v710
        %1094 = vmatmul.mubr.bf16.gmra.mrb[0].mxu0 %v709
        %v1095 = vpop.f32.mrb[0].mxu0
        %v1096 = vadd.f32 0.0, %v1095
        %v1097 = vpop.f32.mrb[0].mxu0
        %v1098 = vpop.f32.mrb[0].mxu0
        %v1099 = vadd.f32 0.0, %v1098
        %v1100 = vpop.f32.mrb[0].mxu0
        %1101 = vmatprep.mubr.bf16.mxu0 %v714
        %1102 = vmatmul.mubr.bf16.gmra.mrb[0].mxu0 %v713
        %v1103 = vpop.f32.mrb[0].mxu0
        %v1104 = vadd.f32 0.0, %v1103
        %v1105 = vpop.f32.mrb[0].mxu0
        %v1106 = vpop.f32.mrb[0].mxu0
        %v1107 = vadd.f32 0.0, %v1106
        %v1108 = vpop.f32.mrb[0].mxu0
        %1109 = vmatprep.mubr.bf16.mxu0 %v718
        %1110 = vmatmul.mubr.bf16.gmra.mrb[0].mxu0 %v717
        %v1111 = vpop.f32.mrb[0].mxu0
        %v1112 = vadd.f32 0.0, %v1111
        %v1113 = vpop.f32.mrb[0].mxu0
        %v1114 = vpop.f32.mrb[0].mxu0
        %v1115 = vadd.f32 0.0, %v1114
        %v1116 = vpop.f32.mrb[0].mxu0
        %1117 = vmatprep.mubr.bf16.mxu0 %v722
        %1118 = vmatmul.mubr.bf16.gmra.mrb[0].mxu0 %v721
        %v1119 = vpop.f32.mrb[0].mxu0
        %v1120 = vadd.f32 0.0, %v1119
        %v1121 = vpop.f32.mrb[0].mxu0
        %v1122 = vpop.f32.mrb[0].mxu0
        %v1123 = vadd.f32 0.0, %v1122
        %v1124 = vpop.f32.mrb[0].mxu0
        %1125 = vmatprep.mubr.bf16.mxu0 %v726
        %1126 = vmatmul.mubr.bf16.gmra.mrb[0].mxu0 %v725
        %v1127 = vpop.f32.mrb[0].mxu0
        %v1128 = vadd.f32 0.0, %v1127
        %v1129 = vpop.f32.mrb[0].mxu0
        %v1130 = vpop.f32.mrb[0].mxu0
        %v1131 = vadd.f32 0.0, %v1130
        %v1132 = vpop.f32.mrb[0].mxu0
        %1133 = vmatprep.mubr.bf16.mxu0 %v730
        %1134 = vmatmul.mubr.bf16.gmra.mrb[0].mxu0 %v729
        %v1135 = vpop.f32.mrb[0].mxu0
        %v1136 = vadd.f32 0.0, %v1135
        %v1137 = vpop.f32.mrb[0].mxu0
        %v1138 = vpop.f32.mrb[0].mxu0
        %v1139 = vadd.f32 0.0, %v1138
        %v1140 = vpop.f32.mrb[0].mxu0
        %1141 = vmatprep.mubr.bf16.mxu0 %v734
        %1142 = vmatmul.mubr.bf16.gmra.mrb[0].mxu0 %v733
        %v1143 = vpop.f32.mrb[0].mxu0
        %v1144 = vadd.f32 0.0, %v1143
        %v1145 = vpop.f32.mrb[0].mxu0
        %v1146 = vpop.f32.mrb[0].mxu0
        %v1147 = vadd.f32 0.0, %v1146
        %v1148 = vpop.f32.mrb[0].mxu0
        %1149 = vmatprep.mubr.bf16.mxu0 %v738
        %1150 = vmatmul.mubr.bf16.gmra.mrb[0].mxu0 %v737
        %v1151 = vpop.f32.mrb[0].mxu0
        %v1152 = vadd.f32 0.0, %v1151
        %v1153 = vpop.f32.mrb[0].mxu0
        %v1154 = vpop.f32.mrb[0].mxu0
        %v1155 = vadd.f32 0.0, %v1154
        %v1156 = vpop.f32.mrb[0].mxu0
        %1157 = vdwg.mxu0
        %1158 = vmatprep.subr.bf16.mxu0 0
        %1159 = vmatpush1.bf16.msra.mxu0 %v949
        %1160 = vmatprep.subr.bf16.mxu0 0
        %1161 = vmatpush1.bf16.msra.mxu0 %v950
        %1162 = vmatprep.subr.bf16.mxu0 0
        %1163 = vmatpush1.bf16.msra.mxu0 %v951
        %1164 = vmatprep.subr.bf16.mxu0 0
        %1165 = vmatpush1.bf16.msra.mxu0 %v952
        %1166 = vmatprep.subr.bf16.mxu0 0
        %1167 = vmatpush1.bf16.msra.mxu0 %v953
        %1168 = vmatprep.subr.bf16.mxu0 0
        %1169 = vmatpush1.bf16.msra.mxu0 %v954
        %1170 = vmatprep.subr.bf16.mxu0 0
        %1171 = vmatpush1.bf16.msra.mxu0 %v955
        %1172 = vmatprep.subr.bf16.mxu0 0
        %1173 = vmatpush1.bf16.msra.mxu0 %v956
        %1174 = vmatprep.subr.bf16.mxu0 0
        %1175 = vmatpush1.bf16.msra.mxu0 %v957
        %1176 = vmatprep.subr.bf16.mxu0 0
        %1177 = vmatpush1.bf16.msra.mxu0 %v958
        %1178 = vmatprep.subr.bf16.mxu0 0
        %1179 = vmatpush1.bf16.msra.mxu0 %v959
        %1180 = vmatprep.subr.bf16.mxu0 0
        %1181 = vmatpush1.bf16.msra.mxu0 %v960
        %1182 = vmatprep.subr.bf16.mxu0 0
        %1183 = vmatpush1.bf16.msra.mxu0 %v961
        %1184 = vmatprep.subr.bf16.mxu0 0
        %1185 = vmatpush1.bf16.msra.mxu0 %v962
        %1186 = vmatprep.subr.bf16.mxu0 0
        %1187 = vmatpush1.bf16.msra.mxu0 %v963
        %1188 = vmatprep.subr.bf16.mxu0 0
        %1189 = vmatpush1.bf16.msra.mxu0 %v964
        %1190 = vmatprep.mubr.bf16.mxu0 %v680
        %1191 = vmatmul.mubr.bf16.gmra.mrb[0].mxu0 %v679
        %v1192 = vpop.f32.mrb[0].mxu0
        %v1193 = vadd.f32 %v1032, %v1192
        %v1194 = vpop.f32.mrb[0].mxu0
        %v1195 = vpop.f32.mrb[0].mxu0
        %v1196 = vadd.f32 %v1035, %v1195
        %v1197 = vpop.f32.mrb[0].mxu0
        %1198 = vmatprep.mubr.bf16.mxu0 %v684
        %1199 = vmatmul.mubr.bf16.gmra.mrb[0].mxu0 %v683
        %v1200 = vpop.f32.mrb[0].mxu0
        %v1201 = vadd.f32 %v1040, %v1200
        %v1202 = vpop.f32.mrb[0].mxu0
        %v1203 = vpop.f32.mrb[0].mxu0
        %v1204 = vadd.f32 %v1043, %v1203
        %v1205 = vpop.f32.mrb[0].mxu0
        %1206 = vmatprep.mubr.bf16.mxu0 %v688
        %1207 = vmatmul.mubr.bf16.gmra.mrb[0].mxu0 %v687
        %v1208 = vpop.f32.mrb[0].mxu0
        %v1209 = vadd.f32 %v1048, %v1208
        %v1210 = vpop.f32.mrb[0].mxu0
        %v1211 = vpop.f32.mrb[0].mxu0
        %v1212 = vadd.f32 %v1051, %v1211
        %v1213 = vpop.f32.mrb[0].mxu0
        %1214 = vmatprep.mubr.bf16.mxu0 %v692
        %1215 = vmatmul.mubr.bf16.gmra.mrb[0].mxu0 %v691
        %v1216 = vpop.f32.mrb[0].mxu0
        %v1217 = vadd.f32 %v1056, %v1216
        %v1218 = vpop.f32.mrb[0].mxu0
        %v1219 = vpop.f32.mrb[0].mxu0
        %v1220 = vadd.f32 %v1059, %v1219
        %v1221 = vpop.f32.mrb[0].mxu0
        %1222 = vmatprep.mubr.bf16.mxu0 %v696
        %1223 = vmatmul.mubr.bf16.gmra.mrb[0].mxu0 %v695
        %v1224 = vpop.f32.mrb[0].mxu0
        %v1225 = vadd.f32 %v1064, %v1224
        %v1226 = vpop.f32.mrb[0].mxu0
        %v1227 = vpop.f32.mrb[0].mxu0
        %v1228 = vadd.f32 %v1067, %v1227
        %v1229 = vpop.f32.mrb[0].mxu0
        %1230 = vmatprep.mubr.bf16.mxu0 %v700
        %1231 = vmatmul.mubr.bf16.gmra.mrb[0].mxu0 %v699
        %v1232 = vpop.f32.mrb[0].mxu0
        %v1233 = vadd.f32 %v1072, %v1232
        %v1234 = vpop.f32.mrb[0].mxu0
        %v1235 = vpop.f32.mrb[0].mxu0
        %v1236 = vadd.f32 %v1075, %v1235
        %v1237 = vpop.f32.mrb[0].mxu0
        %1238 = vmatprep.mubr.bf16.mxu0 %v704
        %1239 = vmatmul.mubr.bf16.gmra.mrb[0].mxu0 %v703
        %v1240 = vpop.f32.mrb[0].mxu0
        %v1241 = vadd.f32 %v1080, %v1240
        %v1242 = vpop.f32.mrb[0].mxu0
        %v1243 = vpop.f32.mrb[0].mxu0
        %v1244 = vadd.f32 %v1083, %v1243
        %v1245 = vpop.f32.mrb[0].mxu0
        %1246 = vmatprep.mubr.bf16.mxu0 %v708
        %1247 = vmatmul.mubr.bf16.gmra.mrb[0].mxu0 %v707
        %v1248 = vpop.f32.mrb[0].mxu0
        %v1249 = vadd.f32 %v1088, %v1248
        %v1250 = vpop.f32.mrb[0].mxu0
        %v1251 = vpop.f32.mrb[0].mxu0
        %v1252 = vadd.f32 %v1091, %v1251
        %v1253 = vpop.f32.mrb[0].mxu0
        %1254 = vmatprep.mubr.bf16.mxu0 %v712
        %1255 = vmatmul.mubr.bf16.gmra.mrb[0].mxu0 %v711
        %v1256 = vpop.f32.mrb[0].mxu0
        %v1257 = vadd.f32 %v1096, %v1256
        %v1258 = vpop.f32.mrb[0].mxu0
        %v1259 = vpop.f32.mrb[0].mxu0
        %v1260 = vadd.f32 %v1099, %v1259
        %v1261 = vpop.f32.mrb[0].mxu0
        %1262 = vmatprep.mubr.bf16.mxu0 %v716
        %1263 = vmatmul.mubr.bf16.gmra.mrb[0].mxu0 %v715
        %v1264 = vpop.f32.mrb[0].mxu0
        %v1265 = vadd.f32 %v1104, %v1264
        %v1266 = vpop.f32.mrb[0].mxu0
        %v1267 = vpop.f32.mrb[0].mxu0
        %v1268 = vadd.f32 %v1107, %v1267
        %v1269 = vpop.f32.mrb[0].mxu0
        %1270 = vmatprep.mubr.bf16.mxu0 %v720
        %1271 = vmatmul.mubr.bf16.gmra.mrb[0].mxu0 %v719
        %v1272 = vpop.f32.mrb[0].mxu0
        %v1273 = vadd.f32 %v1112, %v1272
        %v1274 = vpop.f32.mrb[0].mxu0
        %v1275 = vpop.f32.mrb[0].mxu0
        %v1276 = vadd.f32 %v1115, %v1275
        %v1277 = vpop.f32.mrb[0].mxu0
        %1278 = vmatprep.mubr.bf16.mxu0 %v724
        %1279 = vmatmul.mubr.bf16.gmra.mrb[0].mxu0 %v723
        %v1280 = vpop.f32.mrb[0].mxu0
        %v1281 = vadd.f32 %v1120, %v1280
        %v1282 = vpop.f32.mrb[0].mxu0
        %v1283 = vpop.f32.mrb[0].mxu0
        %v1284 = vadd.f32 %v1123, %v1283
        %v1285 = vpop.f32.mrb[0].mxu0
        %1286 = vmatprep.mubr.bf16.mxu0 %v728
        %1287 = vmatmul.mubr.bf16.gmra.mrb[0].mxu0 %v727
        %v1288 = vpop.f32.mrb[0].mxu0
        %v1289 = vadd.f32 %v1128, %v1288
        %v1290 = vpop.f32.mrb[0].mxu0
        %v1291 = vpop.f32.mrb[0].mxu0
        %v1292 = vadd.f32 %v1131, %v1291
        %v1293 = vpop.f32.mrb[0].mxu0
        %1294 = vmatprep.mubr.bf16.mxu0 %v732
        %1295 = vmatmul.mubr.bf16.gmra.mrb[0].mxu0 %v731
        %v1296 = vpop.f32.mrb[0].mxu0
        %v1297 = vadd.f32 %v1136, %v1296
        %v1298 = vpop.f32.mrb[0].mxu0
        %v1299 = vpop.f32.mrb[0].mxu0
        %v1300 = vadd.f32 %v1139, %v1299
        %v1301 = vpop.f32.mrb[0].mxu0
        %1302 = vmatprep.mubr.bf16.mxu0 %v736
        %1303 = vmatmul.mubr.bf16.gmra.mrb[0].mxu0 %v735
        %v1304 = vpop.f32.mrb[0].mxu0
        %v1305 = vadd.f32 %v1144, %v1304
        %v1306 = vpop.f32.mrb[0].mxu0
        %v1307 = vpop.f32.mrb[0].mxu0
        %v1308 = vadd.f32 %v1147, %v1307
        %v1309 = vpop.f32.mrb[0].mxu0
        %1310 = vmatprep.mubr.bf16.mxu0 %v740
        %1311 = vmatmul.mubr.bf16.gmra.mrb[0].mxu0 %v739
        %v1312 = vpop.f32.mrb[0].mxu0
        %v1313 = vadd.f32 %v1152, %v1312
        %v1314 = vpop.f32.mrb[0].mxu0
        %v1315 = vpop.f32.mrb[0].mxu0
        %v1316 = vadd.f32 %v1155, %v1315
        %v1317 = vpop.f32.mrb[0].mxu0
        %1318 = vdwg.mxu0
        %v1319 = vadd.f32 %v325, %v1193
        %v1320 = vadd.f32 %v326, %v1196
        %v1321 = vadd.f32 %v327, %v1201
        %v1322 = vadd.f32 %v328, %v1204
        %v1323 = vadd.f32 %v329, %v1209
        %v1324 = vadd.f32 %v330, %v1212
        %v1325 = vadd.f32 %v331, %v1217
        %v1326 = vadd.f32 %v332, %v1220
        %v1327 = vadd.f32 %v333, %v1225
        %v1328 = vadd.f32 %v334, %v1228
        %v1329 = vadd.f32 %v335, %v1233
        %v1330 = vadd.f32 %v336, %v1236
        %v1331 = vadd.f32 %v337, %v1241
        %v1332 = vadd.f32 %v338, %v1244
        %v1333 = vadd.f32 %v339, %v1249
        %v1334 = vadd.f32 %v340, %v1252
        %v1335 = vadd.f32 %v341, %v1257
        %v1336 = vadd.f32 %v342, %v1260
        %v1337 = vadd.f32 %v343, %v1265
        %v1338 = vadd.f32 %v344, %v1268
        %v1339 = vadd.f32 %v345, %v1273
        %v1340 = vadd.f32 %v346, %v1276
        %v1341 = vadd.f32 %v347, %v1281
        %v1342 = vadd.f32 %v348, %v1284
        %v1343 = vadd.f32 %v349, %v1289
        %v1344 = vadd.f32 %v350, %v1292
        %v1345 = vadd.f32 %v351, %v1297
        %v1346 = vadd.f32 %v352, %v1300
        %v1347 = vadd.f32 %v353, %v1305
        %v1348 = vadd.f32 %v354, %v1308
        %v1349 = vadd.f32 %v355, %v1313
        %v1350 = vadd.f32 %v356, %v1316
        %vm1351 = vcmask 261120
        %1352 = vst.msk [vmem:[#allocation2] sm:$0xff] %vm1351, %v1319
        %1353 = vst.msk [vmem:[#allocation2 + $0x8] sm:$0xff] %vm1351, %v1320
        %1354 = vst.msk [vmem:[#allocation2 + $0x10] sm:$0xff] %vm1351, %v1321
        %1355 = vst.msk [vmem:[#allocation2 + $0x18] sm:$0xff] %vm1351, %v1322
        %1356 = vst.msk [vmem:[#allocation2 + $0x20] sm:$0xff] %vm1351, %v1323
        %1357 = vst.msk [vmem:[#allocation2 + $0x28] sm:$0xff] %vm1351, %v1324
        %1358 = vst.msk [vmem:[#allocation2 + $0x30] sm:$0xff] %vm1351, %v1325
        %1359 = vst.msk [vmem:[#allocation2 + $0x38] sm:$0xff] %vm1351, %v1326
        %1360 = vst.msk [vmem:[#allocation2 + $0x40] sm:$0xff] %vm1351, %v1327
        %1361 = vst.msk [vmem:[#allocation2 + $0x48] sm:$0xff] %vm1351, %v1328
        %1362 = vst.msk [vmem:[#allocation2 + $0x50] sm:$0xff] %vm1351, %v1329
        %1363 = vst.msk [vmem:[#allocation2 + $0x58] sm:$0xff] %vm1351, %v1330
        %1364 = vst.msk [vmem:[#allocation2 + $0x60] sm:$0xff] %vm1351, %v1331
        %1365 = vst.msk [vmem:[#allocation2 + $0x68] sm:$0xff] %vm1351, %v1332
        %1366 = vst.msk [vmem:[#allocation2 + $0x70] sm:$0xff] %vm1351, %v1333
        %1367 = vst.msk [vmem:[#allocation2 + $0x78] sm:$0xff] %vm1351, %v1334
        %1368 = vst.msk [vmem:[#allocation2 + $0x80] sm:$0xff] %vm1351, %v1335
        %1369 = vst.msk [vmem:[#allocation2 + $0x88] sm:$0xff] %vm1351, %v1336
        %1370 = vst.msk [vmem:[#allocation2 + $0x90] sm:$0xff] %vm1351, %v1337
        %1371 = vst.msk [vmem:[#allocation2 + $0x98] sm:$0xff] %vm1351, %v1338
        %1372 = vst.msk [vmem:[#allocation2 + $0xa0] sm:$0xff] %vm1351, %v1339
        %1373 = vst.msk [vmem:[#allocation2 + $0xa8] sm:$0xff] %vm1351, %v1340
        %1374 = vst.msk [vmem:[#allocation2 + $0xb0] sm:$0xff] %vm1351, %v1341
        %1375 = vst.msk [vmem:[#allocation2 + $0xb8] sm:$0xff] %vm1351, %v1342
        %1376 = vst.msk [vmem:[#allocation2 + $0xc0] sm:$0xff] %vm1351, %v1343
        %1377 = vst.msk [vmem:[#allocation2 + $0xc8] sm:$0xff] %vm1351, %v1344
        %1378 = vst.msk [vmem:[#allocation2 + $0xd0] sm:$0xff] %vm1351, %v1345
        %1379 = vst.msk [vmem:[#allocation2 + $0xd8] sm:$0xff] %vm1351, %v1346
        %1380 = vst.msk [vmem:[#allocation2 + $0xe0] sm:$0xff] %vm1351, %v1347
        %1381 = vst.msk [vmem:[#allocation2 + $0xe8] sm:$0xff] %vm1351, %v1348
        %1382 = vst.msk [vmem:[#allocation2 + $0xf0] sm:$0xff] %vm1351, %v1349
        %1383 = vst.msk [vmem:[#allocation2 + $0xf8] sm:$0xff] %vm1351, %v1350
        %p1384 = scmp.eq.s32.totalorder %s24, 1
        // Predicated region
        $region53: #{tpu_custom_call.1} parent=35 // pred_check
          %p1385 = pneg %p1384
        $region54: #{tpu_custom_call.1} parent=35 // pred_check_branch
          %1387 = sbr.rel (%p1385) target = $region56
        $region55: #{tpu_custom_call.1} parent=35 // pred_region
          %v1388 = vld [vmem:[#allocation2] sm:$0xff]
          %v1389 = vld [vmem:[#allocation2 + $0x8] sm:$0xff]
          %v1390 = vld [vmem:[#allocation2 + $0x10] sm:$0xff]
          %v1391 = vld [vmem:[#allocation2 + $0x18] sm:$0xff]
          %v1392 = vld [vmem:[#allocation2 + $0x20] sm:$0xff]
          %v1393 = vld [vmem:[#allocation2 + $0x28] sm:$0xff]
          %v1394 = vld [vmem:[#allocation2 + $0x30] sm:$0xff]
          %v1395 = vld [vmem:[#allocation2 + $0x38] sm:$0xff]
          %v1396 = vld [vmem:[#allocation2 + $0x40] sm:$0xff]
          %v1397 = vld [vmem:[#allocation2 + $0x48] sm:$0xff]
          %v1398 = vld [vmem:[#allocation2 + $0x50] sm:$0xff]
          %v1399 = vld [vmem:[#allocation2 + $0x58] sm:$0xff]
          %v1400 = vld [vmem:[#allocation2 + $0x60] sm:$0xff]
          %v1401 = vld [vmem:[#allocation2 + $0x68] sm:$0xff]
          %v1402 = vld [vmem:[#allocation2 + $0x70] sm:$0xff]
          %v1403 = vld [vmem:[#allocation2 + $0x78] sm:$0xff]
          %v1404 = vld [vmem:[#allocation2 + $0x80] sm:$0xff]
          %v1405 = vld [vmem:[#allocation2 + $0x88] sm:$0xff]
          %v1406 = vld [vmem:[#allocation2 + $0x90] sm:$0xff]
          %v1407 = vld [vmem:[#allocation2 + $0x98] sm:$0xff]
          %v1408 = vld [vmem:[#allocation2 + $0xa0] sm:$0xff]
          %v1409 = vld [vmem:[#allocation2 + $0xa8] sm:$0xff]
          %v1410 = vld [vmem:[#allocation2 + $0xb0] sm:$0xff]
          %v1411 = vld [vmem:[#allocation2 + $0xb8] sm:$0xff]
          %v1412 = vld [vmem:[#allocation2 + $0xc0] sm:$0xff]
          %v1413 = vld [vmem:[#allocation2 + $0xc8] sm:$0xff]
          %v1414 = vld [vmem:[#allocation2 + $0xd0] sm:$0xff]
          %v1415 = vld [vmem:[#allocation2 + $0xd8] sm:$0xff]
          %v1416 = vld [vmem:[#allocation2 + $0xe0] sm:$0xff]
          %v1417 = vld [vmem:[#allocation2 + $0xe8] sm:$0xff]
          %v1418 = vld [vmem:[#allocation2 + $0xf0] sm:$0xff]
          %v1419 = vld [vmem:[#allocation2 + $0xf8] sm:$0xff]
          %v1420 = vld [vmem:[#allocation5] sm:$0x1]
          %v1422 = vlaneseq
          %v1423 = vshrl.u32 %v1422, 7
          %v1424 = vsub.s32 0, %v1423
          %v1425 = vrot.slane %v1420, %v1424
          %v1427 = vadd.f32 %v1388, %v1425
          %v1428 = vadd.f32 %v1389, %v1425
          %v1429 = vadd.f32 %v1390, %v1425
          %v1430 = vadd.f32 %v1391, %v1425
          %v1431 = vadd.f32 %v1392, %v1425
          %v1432 = vadd.f32 %v1393, %v1425
          %v1433 = vadd.f32 %v1394, %v1425
          %v1434 = vadd.f32 %v1395, %v1425
          %v1435 = vadd.f32 %v1396, %v1425
          %v1436 = vadd.f32 %v1397, %v1425
          %v1437 = vadd.f32 %v1398, %v1425
          %v1438 = vadd.f32 %v1399, %v1425
          %v1439 = vadd.f32 %v1400, %v1425
          %v1440 = vadd.f32 %v1401, %v1425
          %v1441 = vadd.f32 %v1402, %v1425
          %v1442 = vadd.f32 %v1403, %v1425
          %v1443 = vadd.f32 %v1404, %v1425
          %v1444 = vadd.f32 %v1405, %v1425
          %v1445 = vadd.f32 %v1406, %v1425
          %v1446 = vadd.f32 %v1407, %v1425
          %v1447 = vadd.f32 %v1408, %v1425
          %v1448 = vadd.f32 %v1409, %v1425
          %v1449 = vadd.f32 %v1410, %v1425
          %v1450 = vadd.f32 %v1411, %v1425
          %v1451 = vadd.f32 %v1412, %v1425
          %v1452 = vadd.f32 %v1413, %v1425
          %v1453 = vadd.f32 %v1414, %v1425
          %v1454 = vadd.f32 %v1415, %v1425
          %v1455 = vadd.f32 %v1416, %v1425
          %v1456 = vadd.f32 %v1417, %v1425
          %v1457 = vadd.f32 %v1418, %v1425
          %v1458 = vadd.f32 %v1419, %v1425
          %v1459 = vmax.f32 %v1427, 0.0
          %v1460 = vmax.f32 %v1428, 0.0
          %v1461 = vmax.f32 %v1429, 0.0
          %v1462 = vmax.f32 %v1430, 0.0
          %v1463 = vmax.f32 %v1431, 0.0
          %v1464 = vmax.f32 %v1432, 0.0
          %v1465 = vmax.f32 %v1433, 0.0
          %v1466 = vmax.f32 %v1434, 0.0
          %v1467 = vmax.f32 %v1435, 0.0
          %v1468 = vmax.f32 %v1436, 0.0
          %v1469 = vmax.f32 %v1437, 0.0
          %v1470 = vmax.f32 %v1438, 0.0
          %v1471 = vmax.f32 %v1439, 0.0
          %v1472 = vmax.f32 %v1440, 0.0
          %v1473 = vmax.f32 %v1441, 0.0
          %v1474 = vmax.f32 %v1442, 0.0
          %v1475 = vmax.f32 %v1443, 0.0
          %v1476 = vmax.f32 %v1444, 0.0
          %v1477 = vmax.f32 %v1445, 0.0
          %v1478 = vmax.f32 %v1446, 0.0
          %v1479 = vmax.f32 %v1447, 0.0
          %v1480 = vmax.f32 %v1448, 0.0
          %v1481 = vmax.f32 %v1449, 0.0
          %v1482 = vmax.f32 %v1450, 0.0
          %v1483 = vmax.f32 %v1451, 0.0
          %v1484 = vmax.f32 %v1452, 0.0
          %v1485 = vmax.f32 %v1453, 0.0
          %v1486 = vmax.f32 %v1454, 0.0
          %v1487 = vmax.f32 %v1455, 0.0
          %v1488 = vmax.f32 %v1456, 0.0
          %v1489 = vmax.f32 %v1457, 0.0
          %v1490 = vmax.f32 %v1458, 0.0
          %v1491 = vld [vmem:[#allocation7] sm:$0xff]
          %v1492 = vld [vmem:[#allocation7 + $0x8] sm:$0xff]
          %v1493 = vld [vmem:[#allocation7 + $0x10] sm:$0xff]
          %v1494 = vld [vmem:[#allocation7 + $0x18] sm:$0xff]
          %v1496 = vsel %vm1351, %v1459, 0
          %v1499 = vsel %vm1351, %v1460, 0
          %v1502 = vsel %vm1351, %v1461, 0
          %v1505 = vsel %vm1351, %v1462, 0
          %v1508 = vsel %vm1351, %v1463, 0
          %v1511 = vsel %vm1351, %v1464, 0
          %v1514 = vsel %vm1351, %v1465, 0
          %v1517 = vsel %vm1351, %v1466, 0
          %v1520 = vsel %vm1351, %v1467, 0
          %v1523 = vsel %vm1351, %v1468, 0
          %v1526 = vsel %vm1351, %v1469, 0
          %v1529 = vsel %vm1351, %v1470, 0
          %v1532 = vsel %vm1351, %v1471, 0
          %v1535 = vsel %vm1351, %v1472, 0
          %v1538 = vsel %vm1351, %v1473, 0
          %v1541 = vsel %vm1351, %v1474, 0
          %v1544 = vsel %vm1351, %v1475, 0
          %v1547 = vsel %vm1351, %v1476, 0
          %v1550 = vsel %vm1351, %v1477, 0
          %v1553 = vsel %vm1351, %v1478, 0
          %v1556 = vsel %vm1351, %v1479, 0
          %v1559 = vsel %vm1351, %v1480, 0
          %v1562 = vsel %vm1351, %v1481, 0
          %v1565 = vsel %vm1351, %v1482, 0
          %v1568 = vsel %vm1351, %v1483, 0
          %v1571 = vsel %vm1351, %v1484, 0
          %v1574 = vsel %vm1351, %v1485, 0
          %v1577 = vsel %vm1351, %v1486, 0
          %v1580 = vsel %vm1351, %v1487, 0
          %v1583 = vsel %vm1351, %v1488, 0
          %v1586 = vsel %vm1351, %v1489, 0
          %v1589 = vsel %vm1351, %v1490, 0
          %1591 = vmatprep.subr.mxu0 0.0
          %1592 = vmatpush1.msra.mxu0 %v1491
          %1593 = vmatprep.subr.mxu0 0.0
          %1594 = vmatpush1.msra.mxu0 %v1492
          %1595 = vmatprep.subr.mxu0 0.0
          %1596 = vmatpush1.msra.mxu0 %v1493
          %1597 = vmatprep.subr.mxu0 0.0
          %1598 = vmatpush1.msra.mxu0 %v1494
          %1599 = vmatprep.subr.mxu0 0.0
          %1600 = vmatpush1.msra.mxu0 0.0
          %1601 = vmatprep.subr.mxu0 0.0
          %1602 = vmatpush1.msra.mxu0 0.0
          %1603 = vmatprep.subr.mxu0 0.0
          %1604 = vmatpush1.msra.mxu0 0.0
          %1605 = vmatprep.subr.mxu0 0.0
          %1606 = vmatpush1.msra.mxu0 0.0
          %1607 = vmatprep.subr.mxu0 0.0
          %1608 = vmatpush1.msra.mxu0 0.0
          %1609 = vmatprep.subr.mxu0 0.0
          %1610 = vmatpush1.msra.mxu0 0.0
          %1611 = vmatprep.subr.mxu0 0.0
          %1612 = vmatpush1.msra.mxu0 0.0
          %1613 = vmatprep.subr.mxu0 0.0
          %1614 = vmatpush1.msra.mxu0 0.0
          %1615 = vmatprep.subr.mxu0 0.0
          %1616 = vmatpush1.msra.mxu0 0.0
          %1617 = vmatprep.subr.mxu0 0.0
          %1618 = vmatpush1.msra.mxu0 0.0
          %1619 = vmatprep.subr.mxu0 0.0
          %1620 = vmatpush1.msra.mxu0 0.0
          %1621 = vmatprep.subr.mxu0 0.0
          %1622 = vmatpush1.msra.mxu0 0.0
          %1623 = vmatprep.subr.mxu0 0.0
          %1624 = vmatpush1.msra.mxu0 0.0
          %1625 = vmatprep.subr.mxu0 0.0
          %1626 = vmatpush1.msra.mxu0 0.0
          %1627 = vmatprep.subr.mxu0 0.0
          %1628 = vmatpush1.msra.mxu0 0.0
          %1629 = vmatprep.subr.mxu0 0.0
          %1630 = vmatpush1.msra.mxu0 0.0
          %1631 = vmatprep.subr.mxu0 0.0
          %1632 = vmatpush1.msra.mxu0 0.0
          %1633 = vmatprep.subr.mxu0 0.0
          %1634 = vmatpush1.msra.mxu0 0.0
          %1635 = vmatprep.subr.mxu0 0.0
          %1636 = vmatpush1.msra.mxu0 0.0
          %1637 = vmatprep.subr.mxu0 0.0
          %1638 = vmatpush1.msra.mxu0 0.0
          %1639 = vmatprep.subr.mxu0 0.0
          %1640 = vmatpush1.msra.mxu0 0.0
          %1641 = vmatprep.subr.mxu0 0.0
          %1642 = vmatpush1.msra.mxu0 0.0
          %1643 = vmatprep.subr.mxu0 0.0
          %1644 = vmatpush1.msra.mxu0 0.0
          %1645 = vmatprep.subr.mxu0 0.0
          %1646 = vmatpush1.msra.mxu0 0.0
          %1647 = vmatprep.subr.mxu0 0.0
          %1648 = vmatpush1.msra.mxu0 0.0
          %1649 = vmatprep.subr.mxu0 0.0
          %1650 = vmatpush1.msra.mxu0 0.0
          %1651 = vmatprep.subr.mxu0 0.0
          %1652 = vmatpush1.msra.mxu0 0.0
          %1653 = vmatprep.subr.mxu0 0.0
          %1654 = vmatpush1.msra.mxu0 0.0
          %1655 = vmatprep.mubr.f32.mxu0 0.0
          %1656 = vmatmul.mubr.f32.gmra.mrb[0].mxu0 %v1496
          %v1657 = vpop.f32.mrb[0].mxu0
          %v1658 = vadd.f32 0.0, %v1657
          %v1659 = vpop.f32.mrb[0].mxu0
          %1660 = vmatprep.mubr.f32.mxu0 0.0
          %1661 = vmatmul.mubr.f32.gmra.mrb[0].mxu0 %v1499
          %v1662 = vpop.f32.mrb[0].mxu0
          %v1663 = vadd.f32 0.0, %v1662
          %v1664 = vpop.f32.mrb[0].mxu0
          %1665 = vmatprep.mubr.f32.mxu0 0.0
          %1666 = vmatmul.mubr.f32.gmra.mrb[0].mxu0 %v1502
          %v1667 = vpop.f32.mrb[0].mxu0
          %v1668 = vadd.f32 0.0, %v1667
          %v1669 = vpop.f32.mrb[0].mxu0
          %1670 = vmatprep.mubr.f32.mxu0 0.0
          %1671 = vmatmul.mubr.f32.gmra.mrb[0].mxu0 %v1505
          %v1672 = vpop.f32.mrb[0].mxu0
          %v1673 = vadd.f32 0.0, %v1672
          %v1674 = vpop.f32.mrb[0].mxu0
          %1675 = vmatprep.mubr.f32.mxu0 0.0
          %1676 = vmatmul.mubr.f32.gmra.mrb[0].mxu0 %v1508
          %v1677 = vpop.f32.mrb[0].mxu0
          %v1678 = vadd.f32 0.0, %v1677
          %v1679 = vpop.f32.mrb[0].mxu0
          %1680 = vmatprep.mubr.f32.mxu0 0.0
          %1681 = vmatmul.mubr.f32.gmra.mrb[0].mxu0 %v1511
          %v1682 = vpop.f32.mrb[0].mxu0
          %v1683 = vadd.f32 0.0, %v1682
          %v1684 = vpop.f32.mrb[0].mxu0
          %1685 = vmatprep.mubr.f32.mxu0 0.0
          %1686 = vmatmul.mubr.f32.gmra.mrb[0].mxu0 %v1514
          %v1687 = vpop.f32.mrb[0].mxu0
          %v1688 = vadd.f32 0.0, %v1687
          %v1689 = vpop.f32.mrb[0].mxu0
          %1690 = vmatprep.mubr.f32.mxu0 0.0
          %1691 = vmatmul.mubr.f32.gmra.mrb[0].mxu0 %v1517
          %v1692 = vpop.f32.mrb[0].mxu0
          %v1693 = vadd.f32 0.0, %v1692
          %v1694 = vpop.f32.mrb[0].mxu0
          %1695 = vmatprep.mubr.f32.mxu0 0.0
          %1696 = vmatmul.mubr.f32.gmra.mrb[0].mxu0 %v1520
          %v1697 = vpop.f32.mrb[0].mxu0
          %v1698 = vadd.f32 0.0, %v1697
          %v1699 = vpop.f32.mrb[0].mxu0
          %1700 = vmatprep.mubr.f32.mxu0 0.0
          %1701 = vmatmul.mubr.f32.gmra.mrb[0].mxu0 %v1523
          %v1702 = vpop.f32.mrb[0].mxu0
          %v1703 = vadd.f32 0.0, %v1702
          %v1704 = vpop.f32.mrb[0].mxu0
          %1705 = vmatprep.mubr.f32.mxu0 0.0
          %1706 = vmatmul.mubr.f32.gmra.mrb[0].mxu0 %v1526
          %v1707 = vpop.f32.mrb[0].mxu0
          %v1708 = vadd.f32 0.0, %v1707
          %v1709 = vpop.f32.mrb[0].mxu0
          %1710 = vmatprep.mubr.f32.mxu0 0.0
          %1711 = vmatmul.mubr.f32.gmra.mrb[0].mxu0 %v1529
          %v1712 = vpop.f32.mrb[0].mxu0
          %v1713 = vadd.f32 0.0, %v1712
          %v1714 = vpop.f32.mrb[0].mxu0
          %1715 = vmatprep.mubr.f32.mxu0 0.0
          %1716 = vmatmul.mubr.f32.gmra.mrb[0].mxu0 %v1532
          %v1717 = vpop.f32.mrb[0].mxu0
          %v1718 = vadd.f32 0.0, %v1717
          %v1719 = vpop.f32.mrb[0].mxu0
          %1720 = vmatprep.mubr.f32.mxu0 0.0
          %1721 = vmatmul.mubr.f32.gmra.mrb[0].mxu0 %v1535
          %v1722 = vpop.f32.mrb[0].mxu0
          %v1723 = vadd.f32 0.0, %v1722
          %v1724 = vpop.f32.mrb[0].mxu0
          %1725 = vmatprep.mubr.f32.mxu0 0.0
          %1726 = vmatmul.mubr.f32.gmra.mrb[0].mxu0 %v1538
          %v1727 = vpop.f32.mrb[0].mxu0
          %v1728 = vadd.f32 0.0, %v1727
          %v1729 = vpop.f32.mrb[0].mxu0
          %1730 = vmatprep.mubr.f32.mxu0 0.0
          %1731 = vmatmul.mubr.f32.gmra.mrb[0].mxu0 %v1541
          %v1732 = vpop.f32.mrb[0].mxu0
          %v1733 = vadd.f32 0.0, %v1732
          %v1734 = vpop.f32.mrb[0].mxu0
          %1735 = vmatprep.mubr.f32.mxu0 0.0
          %1736 = vmatmul.mubr.f32.gmra.mrb[0].mxu0 %v1544
          %v1737 = vpop.f32.mrb[0].mxu0
          %v1738 = vadd.f32 0.0, %v1737
          %v1739 = vpop.f32.mrb[0].mxu0
          %1740 = vmatprep.mubr.f32.mxu0 0.0
          %1741 = vmatmul.mubr.f32.gmra.mrb[0].mxu0 %v1547
          %v1742 = vpop.f32.mrb[0].mxu0
          %v1743 = vadd.f32 0.0, %v1742
          %v1744 = vpop.f32.mrb[0].mxu0
          %1745 = vmatprep.mubr.f32.mxu0 0.0
          %1746 = vmatmul.mubr.f32.gmra.mrb[0].mxu0 %v1550
          %v1747 = vpop.f32.mrb[0].mxu0
          %v1748 = vadd.f32 0.0, %v1747
          %v1749 = vpop.f32.mrb[0].mxu0
          %1750 = vmatprep.mubr.f32.mxu0 0.0
          %1751 = vmatmul.mubr.f32.gmra.mrb[0].mxu0 %v1553
          %v1752 = vpop.f32.mrb[0].mxu0
          %v1753 = vadd.f32 0.0, %v1752
          %v1754 = vpop.f32.mrb[0].mxu0
          %1755 = vmatprep.mubr.f32.mxu0 0.0
          %1756 = vmatmul.mubr.f32.gmra.mrb[0].mxu0 %v1556
          %v1757 = vpop.f32.mrb[0].mxu0
          %v1758 = vadd.f32 0.0, %v1757
          %v1759 = vpop.f32.mrb[0].mxu0
          %1760 = vmatprep.mubr.f32.mxu0 0.0
          %1761 = vmatmul.mubr.f32.gmra.mrb[0].mxu0 %v1559
          %v1762 = vpop.f32.mrb[0].mxu0
          %v1763 = vadd.f32 0.0, %v1762
          %v1764 = vpop.f32.mrb[0].mxu0
          %1765 = vmatprep.mubr.f32.mxu0 0.0
          %1766 = vmatmul.mubr.f32.gmra.mrb[0].mxu0 %v1562
          %v1767 = vpop.f32.mrb[0].mxu0
          %v1768 = vadd.f32 0.0, %v1767
          %v1769 = vpop.f32.mrb[0].mxu0
          %1770 = vmatprep.mubr.f32.mxu0 0.0
          %1771 = vmatmul.mubr.f32.gmra.mrb[0].mxu0 %v1565
          %v1772 = vpop.f32.mrb[0].mxu0
          %v1773 = vadd.f32 0.0, %v1772
          %v1774 = vpop.f32.mrb[0].mxu0
          %1775 = vmatprep.mubr.f32.mxu0 0.0
          %1776 = vmatmul.mubr.f32.gmra.mrb[0].mxu0 %v1568
          %v1777 = vpop.f32.mrb[0].mxu0
          %v1778 = vadd.f32 0.0, %v1777
          %v1779 = vpop.f32.mrb[0].mxu0
          %1780 = vmatprep.mubr.f32.mxu0 0.0
          %1781 = vmatmul.mubr.f32.gmra.mrb[0].mxu0 %v1571
          %v1782 = vpop.f32.mrb[0].mxu0
          %v1783 = vadd.f32 0.0, %v1782
          %v1784 = vpop.f32.mrb[0].mxu0
          %1785 = vmatprep.mubr.f32.mxu0 0.0
          %1786 = vmatmul.mubr.f32.gmra.mrb[0].mxu0 %v1574
          %v1787 = vpop.f32.mrb[0].mxu0
          %v1788 = vadd.f32 0.0, %v1787
          %v1789 = vpop.f32.mrb[0].mxu0
          %1790 = vmatprep.mubr.f32.mxu0 0.0
          %1791 = vmatmul.mubr.f32.gmra.mrb[0].mxu0 %v1577
          %v1792 = vpop.f32.mrb[0].mxu0
          %v1793 = vadd.f32 0.0, %v1792
          %v1794 = vpop.f32.mrb[0].mxu0
          %1795 = vmatprep.mubr.f32.mxu0 0.0
          %1796 = vmatmul.mubr.f32.gmra.mrb[0].mxu0 %v1580
          %v1797 = vpop.f32.mrb[0].mxu0
          %v1798 = vadd.f32 0.0, %v1797
          %v1799 = vpop.f32.mrb[0].mxu0
          %1800 = vmatprep.mubr.f32.mxu0 0.0
          %1801 = vmatmul.mubr.f32.gmra.mrb[0].mxu0 %v1583
          %v1802 = vpop.f32.mrb[0].mxu0
          %v1803 = vadd.f32 0.0, %v1802
          %v1804 = vpop.f32.mrb[0].mxu0
          %1805 = vmatprep.mubr.f32.mxu0 0.0
          %1806 = vmatmul.mubr.f32.gmra.mrb[0].mxu0 %v1586
          %v1807 = vpop.f32.mrb[0].mxu0
          %v1808 = vadd.f32 0.0, %v1807
          %v1809 = vpop.f32.mrb[0].mxu0
          %1810 = vmatprep.mubr.f32.mxu0 0.0
          %1811 = vmatmul.mubr.f32.gmra.mrb[0].mxu0 %v1589
          %v1812 = vpop.f32.mrb[0].mxu0
          %v1813 = vadd.f32 0.0, %v1812
          %v1814 = vpop.f32.mrb[0].mxu0
          %1815 = vdwg.mxu0
          %v1816 = vpack.c.bf16 %v1663, %v1658
          %v1817 = vpack.c.bf16 %v1673, %v1668
          %v1818 = vpack.c.bf16 %v1683, %v1678
          %v1819 = vpack.c.bf16 %v1693, %v1688
          %v1820 = vpack.c.bf16 %v1703, %v1698
          %v1821 = vpack.c.bf16 %v1713, %v1708
          %v1822 = vpack.c.bf16 %v1723, %v1718
          %v1823 = vpack.c.bf16 %v1733, %v1728
          %v1824 = vpack.c.bf16 %v1743, %v1738
          %v1825 = vpack.c.bf16 %v1753, %v1748
          %v1826 = vpack.c.bf16 %v1763, %v1758
          %v1827 = vpack.c.bf16 %v1773, %v1768
          %v1828 = vpack.c.bf16 %v1783, %v1778
          %v1829 = vpack.c.bf16 %v1793, %v1788
          %v1830 = vpack.c.bf16 %v1803, %v1798
          %v1831 = vpack.c.bf16 %v1813, %v1808
          %v1848 = vunpack.c.l.b16 %v1816
          %v1849 = vunpack.c.h.b16 %v1816
          %v1850 = vunpack.c.l.b16 %v1817
          %v1851 = vunpack.c.h.b16 %v1817
          %v1852 = vunpack.c.l.b16 %v1818
          %v1853 = vunpack.c.h.b16 %v1818
          %v1854 = vunpack.c.l.b16 %v1819
          %v1855 = vunpack.c.h.b16 %v1819
          %v1856 = vunpack.c.l.b16 %v1820
          %v1857 = vunpack.c.h.b16 %v1820
          %v1858 = vunpack.c.l.b16 %v1821
          %v1859 = vunpack.c.h.b16 %v1821
          %v1860 = vunpack.c.l.b16 %v1822
          %v1861 = vunpack.c.h.b16 %v1822
          %v1862 = vunpack.c.l.b16 %v1823
          %v1863 = vunpack.c.h.b16 %v1823
          %v1864 = vunpack.c.l.b16 %v1824
          %v1865 = vunpack.c.h.b16 %v1824
          %v1866 = vunpack.c.l.b16 %v1825
          %v1867 = vunpack.c.h.b16 %v1825
          %v1868 = vunpack.c.l.b16 %v1826
          %v1869 = vunpack.c.h.b16 %v1826
          %v1870 = vunpack.c.l.b16 %v1827
          %v1871 = vunpack.c.h.b16 %v1827
          %v1872 = vunpack.c.l.b16 %v1828
          %v1873 = vunpack.c.h.b16 %v1828
          %v1874 = vunpack.c.l.b16 %v1829
          %v1875 = vunpack.c.h.b16 %v1829
          %v1876 = vunpack.c.l.b16 %v1830
          %v1877 = vunpack.c.h.b16 %v1830
          %v1878 = vunpack.c.l.b16 %v1831
          %v1879 = vunpack.c.h.b16 %v1831
          %v1880 = vpack.c.b16 %v1848, %v1848
          %v1881 = vpack.c.b16 %v1849, %v1849
          %v1882 = vpack.c.b16 %v1850, %v1850
          %v1883 = vpack.c.b16 %v1851, %v1851
          %v1884 = vpack.c.b16 %v1852, %v1852
          %v1885 = vpack.c.b16 %v1853, %v1853
          %v1886 = vpack.c.b16 %v1854, %v1854
          %v1887 = vpack.c.b16 %v1855, %v1855
          %v1888 = vpack.c.b16 %v1856, %v1856
          %v1889 = vpack.c.b16 %v1857, %v1857
          %v1890 = vpack.c.b16 %v1858, %v1858
          %v1891 = vpack.c.b16 %v1859, %v1859
          %v1892 = vpack.c.b16 %v1860, %v1860
          %v1893 = vpack.c.b16 %v1861, %v1861
          %v1894 = vpack.c.b16 %v1862, %v1862
          %v1895 = vpack.c.b16 %v1863, %v1863
          %v1896 = vpack.c.b16 %v1864, %v1864
          %v1897 = vpack.c.b16 %v1865, %v1865
          %v1898 = vpack.c.b16 %v1866, %v1866
          %v1899 = vpack.c.b16 %v1867, %v1867
          %v1900 = vpack.c.b16 %v1868, %v1868
          %v1901 = vpack.c.b16 %v1869, %v1869
          %v1902 = vpack.c.b16 %v1870, %v1870
          %v1903 = vpack.c.b16 %v1871, %v1871
          %v1904 = vpack.c.b16 %v1872, %v1872
          %v1905 = vpack.c.b16 %v1873, %v1873
          %v1906 = vpack.c.b16 %v1874, %v1874
          %v1907 = vpack.c.b16 %v1875, %v1875
          %v1908 = vpack.c.b16 %v1876, %v1876
          %v1909 = vpack.c.b16 %v1877, %v1877
          %v1910 = vpack.c.b16 %v1878, %v1878
          %v1911 = vpack.c.b16 %v1879, %v1879
          %vm1944 = vcmask 257024
          %1945 = vst.msk [vmem:[%s285] sm:$0xf] %vm1944, %v1880
          %1946 = vst.msk [vmem:[%s285 + $0x4] sm:$0xf] %vm1944, %v1881
          %1947 = vst.msk [vmem:[%s285 + $0x8] sm:$0xf] %vm1944, %v1882
          %1948 = vst.msk [vmem:[%s285 + $0xc] sm:$0xf] %vm1944, %v1883
          %1949 = vst.msk [vmem:[%s285 + $0x10] sm:$0xf] %vm1944, %v1884
          %1950 = vst.msk [vmem:[%s285 + $0x14] sm:$0xf] %vm1944, %v1885
          %1951 = vst.msk [vmem:[%s285 + $0x18] sm:$0xf] %vm1944, %v1886
          %1952 = vst.msk [vmem:[%s285 + $0x1c] sm:$0xf] %vm1944, %v1887
          %1953 = vst.msk [vmem:[%s285 + $0x20] sm:$0xf] %vm1944, %v1888
          %1954 = vst.msk [vmem:[%s285 + $0x24] sm:$0xf] %vm1944, %v1889
          %1955 = vst.msk [vmem:[%s285 + $0x28] sm:$0xf] %vm1944, %v1890
          %1956 = vst.msk [vmem:[%s285 + $0x2c] sm:$0xf] %vm1944, %v1891
          %1957 = vst.msk [vmem:[%s285 + $0x30] sm:$0xf] %vm1944, %v1892
          %1958 = vst.msk [vmem:[%s285 + $0x34] sm:$0xf] %vm1944, %v1893
          %1959 = vst.msk [vmem:[%s285 + $0x38] sm:$0xf] %vm1944, %v1894
          %1960 = vst.msk [vmem:[%s285 + $0x3c] sm:$0xf] %vm1944, %v1895
          %1961 = vst.msk [vmem:[%s285 + $0x40] sm:$0xf] %vm1944, %v1896
          %1962 = vst.msk [vmem:[%s285 + $0x44] sm:$0xf] %vm1944, %v1897
          %1963 = vst.msk [vmem:[%s285 + $0x48] sm:$0xf] %vm1944, %v1898
          %1964 = vst.msk [vmem:[%s285 + $0x4c] sm:$0xf] %vm1944, %v1899
          %1965 = vst.msk [vmem:[%s285 + $0x50] sm:$0xf] %vm1944, %v1900
          %1966 = vst.msk [vmem:[%s285 + $0x54] sm:$0xf] %vm1944, %v1901
          %1967 = vst.msk [vmem:[%s285 + $0x58] sm:$0xf] %vm1944, %v1902
          %1968 = vst.msk [vmem:[%s285 + $0x5c] sm:$0xf] %vm1944, %v1903
          %1969 = vst.msk [vmem:[%s285 + $0x60] sm:$0xf] %vm1944, %v1904
          %1970 = vst.msk [vmem:[%s285 + $0x64] sm:$0xf] %vm1944, %v1905
          %1971 = vst.msk [vmem:[%s285 + $0x68] sm:$0xf] %vm1944, %v1906
          %1972 = vst.msk [vmem:[%s285 + $0x6c] sm:$0xf] %vm1944, %v1907
          %1973 = vst.msk [vmem:[%s285 + $0x70] sm:$0xf] %vm1944, %v1908
          %1974 = vst.msk [vmem:[%s285 + $0x74] sm:$0xf] %vm1944, %v1909
          %1975 = vst.msk [vmem:[%s285 + $0x78] sm:$0xf] %vm1944, %v1910
          %1976 = vst.msk [vmem:[%s285 + $0x7c] sm:$0xf] %vm1944, %v1911
        $region56: #{tpu_custom_call.1} parent=35 // pred_fallthru
          _
        %s1977 = smul.u32 32, %s23
        %p1978 = scmp.lt.s32.totalorder %s1977, 127
        %s1979 = scalar_select %p1978, %s1977, 127
        %s1980 = smul.addr %s1979, 4
        %s1981 = scalar_lea.vmem %s4, %s1980
        // Predicated region
        $region57: #{tpu_custom_call.1} parent=35 // pred_check
          %p1982 = pneg %p145
        $region58: #{tpu_custom_call.1} parent=35 // pred_check_branch
          %1984 = sbr.rel (%p1982) target = $region60
        $region59: #{tpu_custom_call.1} parent=35 // pred_region
          %s1985 = smul.u32 32, %s23
        $region60: #{tpu_custom_call.1} parent=35 // pred_fallthru
          _
      $region36: #{tpu_custom_call.1} parent=5 // pred_fallthru
        _
      %p1986 = scmp.le.s32.totalorder 2, %s14
      // Predicated region
      $region61: #{tpu_custom_call.1} parent=5 // pred_check
        %p1987 = pneg %p1986
      $region62: #{tpu_custom_call.1} parent=5 // pred_check_branch
        %1989 = sbr.rel (%p1987) target = $region64
      $region63: #{tpu_custom_call.1} parent=5 // pred_region
        %s1990 = ssub.s32 %s14, 2
        // Predicated region
        $region65: #{tpu_custom_call.1} parent=63 // pred_check
          %p1991 = pneg %p151
        $region66: #{tpu_custom_call.1} parent=63 // pred_check_branch
          %1993 = sbr.rel (%p1991) target = $region68
        $region67: #{tpu_custom_call.1} parent=63 // pred_region
          %s1994 = smul.u32 32, %s25
          %p1995 = scmp.lt.s32.totalorder %s1994, 127
          %s1996 = scalar_select %p1995, %s1994, 127
          %s1997 = smul.addr %s1996, 4
          %s1998 = scalar_lea.vmem %s4, %s1997
        $region68: #{tpu_custom_call.1} parent=63 // pred_fallthru
          _
      $region64: #{tpu_custom_call.1} parent=5 // pred_fallthru
        _
    $region6: #{tpu_custom_call.1} parent=1 // loop_footer
      %s18 = sadd.s32 1, %s14
    $region7: #{tpu_custom_call.1} parent=1 // loop_footer_branch
      %13 = sbr.rel target = $region3
    $region8: #{tpu_custom_call.1} parent=1 // loop_exit
      _
    %1999 = vsyncpa [#allocation4], 1
    %s2000 = scalar_lea.sflag [#allocation4], 1
    %2001 = vsyncpa %s2000, 1
    %2002 = vsyncpa [#allocation6], 1

</llo_original>
